<compile_context>
chip_gen: v7x
topology: tpu7x:2x2x1
jax: 0.10.0
libtpu: 0.0.40
codegen_flags: <defaults>
</compile_context>

<pallas_src>
import functools

import jax
import jax.numpy as jnp
import numpy as np
from jax.experimental import pallas as pl
from jax.experimental.pallas import tpu as pltpu


def _shift_flat(v, off, size):
    """result[:, p] = v[:, (p + off) mod size]  (cyclic shift along lanes)."""
    s = off % size
    if s == 0:
        return v
    return jnp.concatenate([v[:, s:], v[:, :s]], axis=1)


def _conditioning_kernel(x_ref, m_ref, dr_ref, di_ref, er_ref, ei_ref,
                         tap_ref,
                         w1_ref, b1_ref, g1_ref, be1_ref,
                         w2_ref, b2_ref, g2_ref, be2_ref,
                         o_ref, *, groups, H, W):
    HW = H * W
    X = x_ref[0].astype(jnp.float32)      # (C, HW)  lane-dense
    M = m_ref[...].astype(jnp.float32)    # (C, HW)
    taps = tap_ref[...]                   # (9, HW)  tap validity masks (f32)

    # ---------------- FF parser: real(ifft2(fft2(x) * M)) -------------------
    # fft2 of a flattened (H*W,) channel == row-vector @ kron(F_H, F_W); the
    # inverse uses conj(kron)/(H*W).  Channels stacked in M -> 4 MXU matmuls,
    # all in the same (C, HW) layout used by the conv below.
    Vr = jnp.dot(X, dr_ref[...], preferred_element_type=jnp.float32)
    Vi = jnp.dot(X, di_ref[...], preferred_element_type=jnp.float32)
    Wr = M * Vr
    Wi = M * Vi
    xr = (jnp.dot(Wr, er_ref[...], preferred_element_type=jnp.float32)
          - jnp.dot(Wi, ei_ref[...], preferred_element_type=jnp.float32))

    # -------------- Block: 3x3 conv + GroupNorm + SiLU ----------------------
    def conv_gn_silu(inp, w_ref, b_ref, g_ref, be_ref):
        # Build the 9 shifted + zero-masked taps in VMEM (no HBM im2col) and
        # fold them into K: one (O, 9*Cin) @ (9*Cin, HW) matmul does the conv.
        cols = []
        k = 0
        for dy in (-1, 0, 1):
            for dx in (-1, 0, 1):
                off = dy * W + dx
                shifted = _shift_flat(inp, off, HW)
                cols.append(shifted * taps[k:k + 1, :])
                k += 1
        patches = jnp.concatenate(cols, axis=0)                  # (9*Cin, HW)
        acc = jnp.dot(w_ref[...].astype(jnp.float32), patches,
                      preferred_element_type=jnp.float32)        # (O, HW)
        acc = acc + b_ref[...].astype(jnp.float32)

        # GroupNorm (biased variance, eps=1e-5), one-pass statistics.
        n_out = acc.shape[0]
        cg = n_out // groups
        n = cg * HW
        y = acc.reshape(groups, n)
        s1 = jnp.sum(y, axis=1, keepdims=True)
        s2 = jnp.sum(y * y, axis=1, keepdims=True)
        mean = s1 * (1.0 / n)
        var = s2 * (1.0 / n) - mean * mean
        y = ((y - mean) * jax.lax.rsqrt(var + 1e-5)).reshape(n_out, HW)
        z = y * g_ref[...].astype(jnp.float32) + be_ref[...].astype(jnp.float32)
        # SiLU (exp on the EUP)
        return z * (1.0 / (1.0 + jnp.exp(-z)))

    h = conv_gn_silu(xr, w1_ref, b1_ref, g1_ref, be1_ref)
    h = conv_gn_silu(h, w2_ref, b2_ref, g2_ref, be2_ref)
    o_ref[0] = (h + xr).astype(o_ref.dtype)          # res_conv == Identity


# ----------------------------------------------------------------------------
# Wrapper: trace-time constants + single fused pallas_call
# ----------------------------------------------------------------------------
def conditioning_forward(x, params, groups=8):
    B, C, H, W = x.shape
    HW = H * W
    O = params["w1"].shape[0]

    # --- numpy trace-time constants (DFT matrices + tap validity masks) -----
    def _dft(n):
        k = np.arange(n)
        return np.exp((-2j * np.pi / n) * np.outer(k, k))

    FH, FW = _dft(H), _dft(W)
    Dfwd = np.kron(FH, FW)                    # flat forward 2-D DFT (symmetric)
    Dinv = np.conj(Dfwd) / (H * W)            # flat inverse 2-D DFT
    Dr = jnp.asarray(Dfwd.real, jnp.float32)
    Di = jnp.asarray(Dfwd.imag, jnp.float32)
    Er = jnp.asarray(Dinv.real, jnp.float32)
    Ei = jnp.asarray(Dinv.imag, jnp.float32)

    hh = np.arange(H)[:, None]
    ww = np.arange(W)[None, :]
    tap_masks = np.stack([
        ((hh + dy >= 0) & (hh + dy < H) & (ww + dx >= 0) & (ww + dx < W))
        .reshape(HW)
        for dy in (-1, 0, 1) for dx in (-1, 0, 1)
    ]).astype(np.float32)
    tap_masks = jnp.asarray(tap_masks)        # (9, HW)

    # --- cheap parameter / activation reshapes (lane-dense layouts) ---------
    w1f = jnp.transpose(params["w1"], (0, 2, 3, 1)).reshape(O, 9 * C)
    w2f = jnp.transpose(params["w2"], (0, 2, 3, 1)).reshape(O, 9 * O)
    b1 = params["b1"].reshape(O, 1)
    g1 = params["g1"].reshape(O, 1)
    be1 = params["be1"].reshape(O, 1)
    b2 = params["b2"].reshape(O, 1)
    g2 = params["g2"].reshape(O, 1)
    be2 = params["be2"].reshape(O, 1)
    m_flat = params["attn_map"].reshape(C, HW)
    x_flat = x.reshape(B, C, HW)

    kernel = functools.partial(_conditioning_kernel, groups=groups, H=H, W=W)
    c2 = lambda b: (0, 0)   # constants: same block every grid step
    out = pl.pallas_call(
        kernel,
        out_shape=jax.ShapeDtypeStruct((B, O, HW), x.dtype),
        grid=(B,),
        in_specs=[
            pl.BlockSpec((1, C, HW), lambda b: (b, 0, 0)),   # x
            pl.BlockSpec((C, HW), c2),                       # attn_map
            pl.BlockSpec((HW, HW), c2),                      # Dr
            pl.BlockSpec((HW, HW), c2),                      # Di
            pl.BlockSpec((HW, HW), c2),                      # Er
            pl.BlockSpec((HW, HW), c2),                      # Ei
            pl.BlockSpec((9, HW), c2),                       # tap masks
            pl.BlockSpec((O, 9 * C), c2),                    # w1
            pl.BlockSpec((O, 1), c2),                        # b1
            pl.BlockSpec((O, 1), c2),                        # g1
            pl.BlockSpec((O, 1), c2),                        # be1
            pl.BlockSpec((O, 9 * O), c2),                    # w2
            pl.BlockSpec((O, 1), c2),                        # b2
            pl.BlockSpec((O, 1), c2),                        # g2
            pl.BlockSpec((O, 1), c2),                        # be2
        ],
        out_specs=pl.BlockSpec((1, O, HW), lambda b: (b, 0, 0)),
        compiler_params=pltpu.CompilerParams(
            dimension_semantics=("parallel",)),
    )(x_flat, m_flat, Dr, Di, Er, Ei, tap_masks,
      w1f, b1, g1, be1, w2f, b2, g2, be2)
    return out.reshape(B, O, H, W)


# ----------------------------------------------------------------------------
# Pure-JAX reference (numerical sanity check)
# ----------------------------------------------------------------------------
def _reference(x, params, groups=8):
    xf = jnp.fft.fft2(x)
    xf = xf * params["attn_map"][None].astype(xf.dtype)
    xr = jnp.real(jnp.fft.ifft2(xf)).astype(x.dtype)

    def block(inp, w, b, gamma, beta):
        y = jax.lax.conv_general_dilated(
            inp, w, window_strides=(1, 1), padding="SAME",
            dimension_numbers=("NCHW", "OIHW", "NCHW"),
            precision=jax.lax.Precision.HIGHEST)
        y = y + b[None, :, None, None]
        Bz, Cz, Hz, Wz = y.shape
        yg = y.reshape(Bz, groups, (Cz // groups) * Hz * Wz)
        mean = yg.mean(axis=2, keepdims=True)
        var = ((yg - mean) ** 2).mean(axis=2, keepdims=True)
        yn = ((yg - mean) / jnp.sqrt(var + 1e-5)).reshape(Bz, Cz, Hz, Wz)
        z = yn * gamma[None, :, None, None] + beta[None, :, None, None]
        return z * jax.nn.sigmoid(z)

    h = block(xr, params["w1"], params["b1"], params["g1"], params["be1"])
    h = block(h, params["w2"], params["b2"], params["g2"], params["be2"])
    return h + xr


if __name__ == "__main__":
    B, dim, fmap, groups = 2, 8, 16, 8
    key = jax.random.PRNGKey(0)
    k1, k2, k3, k4, k5, k6 = jax.random.split(key, 6)

    x = jax.random.normal(k1, (B, dim, fmap, fmap), jnp.float32)

    # Deterministic synthetic parameters (shapes from Conditioning.__init__).
    params = {
        "attn_map": 1.0 + 0.1 * jax.random.normal(k2, (dim, fmap, fmap),
                                                  jnp.float32),
        "w1": 0.2 * jax.random.normal(k3, (dim, dim, 3, 3), jnp.float32),
        "b1": 0.05 * jax.random.normal(k4, (dim,), jnp.float32),
        "w2": 0.2 * jax.random.normal(k5, (dim, dim, 3, 3), jnp.float32),
        "b2": 0.05 * jax.random.normal(k6, (dim,), jnp.float32),
        "g1": jnp.ones((dim,), jnp.float32),   # GroupNorm affine init
        "be1": jnp.zeros((dim,), jnp.float32),
        "g2": jnp.ones((dim,), jnp.float32),
        "be2": jnp.zeros((dim,), jnp.float32),
    }

    out = jax.jit(lambda xx: conditioning_forward(xx, params, groups))(x)
    out = jax.block_until_ready(out)

    ref = jax.block_until_ready(_reference(x, params, groups))
    np.testing.assert_allclose(np.asarray(out), np.asarray(ref),
                               rtol=3e-3, atol=3e-3)
    print("KERNEL_OK")
</pallas_src>

<mosaic_0001>
module attributes {stable_mosaic.version = 11 : i64} {
  func.func @_conditioning_kernel(%arg0: i32, %arg1: memref<1x8x256xf32, #tpu.memory_space<vmem>>, %arg2: memref<8x256xf32, #tpu.memory_space<vmem>>, %arg3: memref<256x256xf32, #tpu.memory_space<vmem>>, %arg4: memref<256x256xf32, #tpu.memory_space<vmem>>, %arg5: memref<256x256xf32, #tpu.memory_space<vmem>>, %arg6: memref<256x256xf32, #tpu.memory_space<vmem>>, %arg7: memref<9x256xf32, #tpu.memory_space<vmem>>, %arg8: memref<8x72xf32, #tpu.memory_space<vmem>>, %arg9: memref<8x1xf32, #tpu.memory_space<vmem>>, %arg10: memref<8x1xf32, #tpu.memory_space<vmem>>, %arg11: memref<8x1xf32, #tpu.memory_space<vmem>>, %arg12: memref<8x72xf32, #tpu.memory_space<vmem>>, %arg13: memref<8x1xf32, #tpu.memory_space<vmem>>, %arg14: memref<8x1xf32, #tpu.memory_space<vmem>>, %arg15: memref<8x1xf32, #tpu.memory_space<vmem>>, %arg16: memref<1x8x256xf32, #tpu.memory_space<vmem>>) attributes {dimension_semantics = [#tpu.dimension_semantics<parallel>], iteration_bounds = array<i64: 2>, scalar_prefetch = 0 : i64, scratch_operands = 0 : i64, tpu.core_type = #tpu.core_type<tc>, window_params = [{transform_indices = @transform_0, window_bounds = array<i64: 1, 8, 256>}, {pipeline_mode = #tpu.pipeline_mode<synchronous>, transform_indices = @transform_1, window_bounds = array<i64: 8, 256>}, {pipeline_mode = #tpu.pipeline_mode<synchronous>, transform_indices = @transform_2, window_bounds = array<i64: 256, 256>}, {pipeline_mode = #tpu.pipeline_mode<synchronous>, transform_indices = @transform_3, window_bounds = array<i64: 256, 256>}, {pipeline_mode = #tpu.pipeline_mode<synchronous>, transform_indices = @transform_4, window_bounds = array<i64: 256, 256>}, {pipeline_mode = #tpu.pipeline_mode<synchronous>, transform_indices = @transform_5, window_bounds = array<i64: 256, 256>}, {pipeline_mode = #tpu.pipeline_mode<synchronous>, transform_indices = @transform_6, window_bounds = array<i64: 9, 256>}, {pipeline_mode = #tpu.pipeline_mode<synchronous>, transform_indices = @transform_7, window_bounds = array<i64: 8, 72>}, {pipeline_mode = #tpu.pipeline_mode<synchronous>, transform_indices = @transform_8, window_bounds = array<i64: 8, 1>}, {pipeline_mode = #tpu.pipeline_mode<synchronous>, transform_indices = @transform_9, window_bounds = array<i64: 8, 1>}, {pipeline_mode = #tpu.pipeline_mode<synchronous>, transform_indices = @transform_10, window_bounds = array<i64: 8, 1>}, {pipeline_mode = #tpu.pipeline_mode<synchronous>, transform_indices = @transform_11, window_bounds = array<i64: 8, 72>}, {pipeline_mode = #tpu.pipeline_mode<synchronous>, transform_indices = @transform_12, window_bounds = array<i64: 8, 1>}, {pipeline_mode = #tpu.pipeline_mode<synchronous>, transform_indices = @transform_13, window_bounds = array<i64: 8, 1>}, {pipeline_mode = #tpu.pipeline_mode<synchronous>, transform_indices = @transform_14, window_bounds = array<i64: 8, 1>}, {transform_indices = @transform_15, window_bounds = array<i64: 1, 8, 256>}]} {
    %c0 = arith.constant 0 : index
    %c0_0 = arith.constant 0 : index
    %c0_1 = arith.constant 0 : index
    %0 = vector.load %arg1[%c0, %c0_0, %c0_1] : memref<1x8x256xf32, #tpu.memory_space<vmem>>, vector<1x8x256xf32>
    %1 = vector.shape_cast %0 : vector<1x8x256xf32> to vector<8x256xf32>
    %c0_2 = arith.constant 0 : index
    %c0_3 = arith.constant 0 : index
    %2 = vector.load %arg2[%c0_2, %c0_3] : memref<8x256xf32, #tpu.memory_space<vmem>>, vector<8x256xf32>
    %c0_4 = arith.constant 0 : index
    %c0_5 = arith.constant 0 : index
    %3 = vector.load %arg7[%c0_4, %c0_5] : memref<9x256xf32, #tpu.memory_space<vmem>>, vector<9x256xf32>
    %c0_6 = arith.constant 0 : index
    %c0_7 = arith.constant 0 : index
    %4 = vector.load %arg3[%c0_6, %c0_7] : memref<256x256xf32, #tpu.memory_space<vmem>>, vector<256x256xf32>
    %cst = arith.constant dense<0.000000e+00> : vector<8x256xf32>
    %5 = tpu.matmul %1, %4, %cst {dimension_numbers = #tpu.dot_dimension_numbers<[1], [0], [0], [1], [0, 0, 1, 1], [], []>} : vector<8x256xf32>, vector<256x256xf32>, vector<8x256xf32> -> vector<8x256xf32>
    %c0_8 = arith.constant 0 : index
    %c0_9 = arith.constant 0 : index
    %6 = vector.load %arg4[%c0_8, %c0_9] : memref<256x256xf32, #tpu.memory_space<vmem>>, vector<256x256xf32>
    %cst_10 = arith.constant dense<0.000000e+00> : vector<8x256xf32>
    %7 = tpu.matmul %1, %6, %cst_10 {dimension_numbers = #tpu.dot_dimension_numbers<[1], [0], [0], [1], [0, 0, 1, 1], [], []>} : vector<8x256xf32>, vector<256x256xf32>, vector<8x256xf32> -> vector<8x256xf32>
    %8 = arith.mulf %2, %5 : vector<8x256xf32>
    %9 = arith.mulf %2, %7 : vector<8x256xf32>
    %c0_11 = arith.constant 0 : index
    %c0_12 = arith.constant 0 : index
    %10 = vector.load %arg5[%c0_11, %c0_12] : memref<256x256xf32, #tpu.memory_space<vmem>>, vector<256x256xf32>
    %cst_13 = arith.constant dense<0.000000e+00> : vector<8x256xf32>
    %11 = tpu.matmul %8, %10, %cst_13 {dimension_numbers = #tpu.dot_dimension_numbers<[1], [0], [0], [1], [0, 0, 1, 1], [], []>} : vector<8x256xf32>, vector<256x256xf32>, vector<8x256xf32> -> vector<8x256xf32>
    %c0_14 = arith.constant 0 : index
    %c0_15 = arith.constant 0 : index
    %12 = vector.load %arg6[%c0_14, %c0_15] : memref<256x256xf32, #tpu.memory_space<vmem>>, vector<256x256xf32>
    %cst_16 = arith.constant dense<0.000000e+00> : vector<8x256xf32>
    %13 = tpu.matmul %9, %12, %cst_16 {dimension_numbers = #tpu.dot_dimension_numbers<[1], [0], [0], [1], [0, 0, 1, 1], [], []>} : vector<8x256xf32>, vector<256x256xf32>, vector<8x256xf32> -> vector<8x256xf32>
    %14 = arith.subf %11, %13 : vector<8x256xf32>
    %15 = vector.extract_strided_slice %14 {offsets = [0, 239], sizes = [8, 17], strides = [1, 1]} : vector<8x256xf32> to vector<8x17xf32>
    %16 = vector.extract_strided_slice %14 {offsets = [0, 0], sizes = [8, 239], strides = [1, 1]} : vector<8x256xf32> to vector<8x239xf32>
    %17 = tpu.concatenate %15, %16 in 1 : vector<8x17xf32>, vector<8x239xf32> -> vector<8x256xf32>
    %18 = vector.extract_strided_slice %3 {offsets = [0, 0], sizes = [1, 256], strides = [1, 1]} : vector<9x256xf32> to vector<1x256xf32>
    %19 = vector.broadcast %18 : vector<1x256xf32> to vector<8x256xf32>
    %20 = arith.mulf %17, %19 : vector<8x256xf32>
    %21 = vector.extract_strided_slice %14 {offsets = [0, 240], sizes = [8, 16], strides = [1, 1]} : vector<8x256xf32> to vector<8x16xf32>
    %22 = vector.extract_strided_slice %14 {offsets = [0, 0], sizes = [8, 240], strides = [1, 1]} : vector<8x256xf32> to vector<8x240xf32>
    %23 = tpu.concatenate %21, %22 in 1 : vector<8x16xf32>, vector<8x240xf32> -> vector<8x256xf32>
    %24 = vector.extract_strided_slice %3 {offsets = [1, 0], sizes = [1, 256], strides = [1, 1]} : vector<9x256xf32> to vector<1x256xf32>
    %25 = vector.broadcast %24 : vector<1x256xf32> to vector<8x256xf32>
    %26 = arith.mulf %23, %25 : vector<8x256xf32>
    %27 = vector.extract_strided_slice %14 {offsets = [0, 241], sizes = [8, 15], strides = [1, 1]} : vector<8x256xf32> to vector<8x15xf32>
    %28 = vector.extract_strided_slice %14 {offsets = [0, 0], sizes = [8, 241], strides = [1, 1]} : vector<8x256xf32> to vector<8x241xf32>
    %29 = tpu.concatenate %27, %28 in 1 : vector<8x15xf32>, vector<8x241xf32> -> vector<8x256xf32>
    %30 = vector.extract_strided_slice %3 {offsets = [2, 0], sizes = [1, 256], strides = [1, 1]} : vector<9x256xf32> to vector<1x256xf32>
    %31 = vector.broadcast %30 : vector<1x256xf32> to vector<8x256xf32>
    %32 = arith.mulf %29, %31 : vector<8x256xf32>
    %33 = vector.extract_strided_slice %14 {offsets = [0, 255], sizes = [8, 1], strides = [1, 1]} : vector<8x256xf32> to vector<8x1xf32>
    %34 = vector.extract_strided_slice %14 {offsets = [0, 0], sizes = [8, 255], strides = [1, 1]} : vector<8x256xf32> to vector<8x255xf32>
    %35 = tpu.concatenate %33, %34 in 1 : vector<8x1xf32>, vector<8x255xf32> -> vector<8x256xf32>
    %36 = vector.extract_strided_slice %3 {offsets = [3, 0], sizes = [1, 256], strides = [1, 1]} : vector<9x256xf32> to vector<1x256xf32>
    %37 = vector.broadcast %36 : vector<1x256xf32> to vector<8x256xf32>
    %38 = arith.mulf %35, %37 : vector<8x256xf32>
    %39 = vector.extract_strided_slice %3 {offsets = [4, 0], sizes = [1, 256], strides = [1, 1]} : vector<9x256xf32> to vector<1x256xf32>
    %40 = vector.broadcast %39 : vector<1x256xf32> to vector<8x256xf32>
    %41 = arith.mulf %14, %40 : vector<8x256xf32>
    %42 = vector.extract_strided_slice %14 {offsets = [0, 1], sizes = [8, 255], strides = [1, 1]} : vector<8x256xf32> to vector<8x255xf32>
    %43 = vector.extract_strided_slice %14 {offsets = [0, 0], sizes = [8, 1], strides = [1, 1]} : vector<8x256xf32> to vector<8x1xf32>
    %44 = tpu.concatenate %42, %43 in 1 : vector<8x255xf32>, vector<8x1xf32> -> vector<8x256xf32>
    %45 = vector.extract_strided_slice %3 {offsets = [5, 0], sizes = [1, 256], strides = [1, 1]} : vector<9x256xf32> to vector<1x256xf32>
    %46 = vector.broadcast %45 : vector<1x256xf32> to vector<8x256xf32>
    %47 = arith.mulf %44, %46 : vector<8x256xf32>
    %48 = vector.extract_strided_slice %14 {offsets = [0, 15], sizes = [8, 241], strides = [1, 1]} : vector<8x256xf32> to vector<8x241xf32>
    %49 = vector.extract_strided_slice %14 {offsets = [0, 0], sizes = [8, 15], strides = [1, 1]} : vector<8x256xf32> to vector<8x15xf32>
    %50 = tpu.concatenate %48, %49 in 1 : vector<8x241xf32>, vector<8x15xf32> -> vector<8x256xf32>
    %51 = vector.extract_strided_slice %3 {offsets = [6, 0], sizes = [1, 256], strides = [1, 1]} : vector<9x256xf32> to vector<1x256xf32>
    %52 = vector.broadcast %51 : vector<1x256xf32> to vector<8x256xf32>
    %53 = arith.mulf %50, %52 : vector<8x256xf32>
    %54 = vector.extract_strided_slice %14 {offsets = [0, 16], sizes = [8, 240], strides = [1, 1]} : vector<8x256xf32> to vector<8x240xf32>
    %55 = vector.extract_strided_slice %14 {offsets = [0, 0], sizes = [8, 16], strides = [1, 1]} : vector<8x256xf32> to vector<8x16xf32>
    %56 = tpu.concatenate %54, %55 in 1 : vector<8x240xf32>, vector<8x16xf32> -> vector<8x256xf32>
    %57 = vector.extract_strided_slice %3 {offsets = [7, 0], sizes = [1, 256], strides = [1, 1]} : vector<9x256xf32> to vector<1x256xf32>
    %58 = vector.broadcast %57 : vector<1x256xf32> to vector<8x256xf32>
    %59 = arith.mulf %56, %58 : vector<8x256xf32>
    %60 = vector.extract_strided_slice %14 {offsets = [0, 17], sizes = [8, 239], strides = [1, 1]} : vector<8x256xf32> to vector<8x239xf32>
    %61 = vector.extract_strided_slice %14 {offsets = [0, 0], sizes = [8, 17], strides = [1, 1]} : vector<8x256xf32> to vector<8x17xf32>
    %62 = tpu.concatenate %60, %61 in 1 : vector<8x239xf32>, vector<8x17xf32> -> vector<8x256xf32>
    %63 = vector.extract_strided_slice %3 {offsets = [8, 0], sizes = [1, 256], strides = [1, 1]} : vector<9x256xf32> to vector<1x256xf32>
    %64 = vector.broadcast %63 : vector<1x256xf32> to vector<8x256xf32>
    %65 = arith.mulf %62, %64 : vector<8x256xf32>
    %66 = tpu.concatenate %20, %26, %32, %38, %41, %47, %53, %59, %65 in 0 : vector<8x256xf32>, vector<8x256xf32>, vector<8x256xf32>, vector<8x256xf32>, vector<8x256xf32>, vector<8x256xf32>, vector<8x256xf32>, vector<8x256xf32>, vector<8x256xf32> -> vector<72x256xf32>
    %c0_17 = arith.constant 0 : index
    %c0_18 = arith.constant 0 : index
    %67 = vector.load %arg8[%c0_17, %c0_18] : memref<8x72xf32, #tpu.memory_space<vmem>>, vector<8x72xf32>
    %cst_19 = arith.constant dense<0.000000e+00> : vector<8x256xf32>
    %68 = tpu.matmul %67, %66, %cst_19 {dimension_numbers = #tpu.dot_dimension_numbers<[1], [0], [0], [1], [0, 0, 1, 1], [], []>} : vector<8x72xf32>, vector<72x256xf32>, vector<8x256xf32> -> vector<8x256xf32>
    %c0_20 = arith.constant 0 : index
    %c0_21 = arith.constant 0 : index
    %69 = vector.load %arg9[%c0_20, %c0_21] : memref<8x1xf32, #tpu.memory_space<vmem>>, vector<8x1xf32>
    %70 = vector.broadcast %69 : vector<8x1xf32> to vector<8x256xf32>
    %71 = arith.addf %68, %70 : vector<8x256xf32>
    %cst_22 = arith.constant dense<0.000000e+00> : vector<8xf32>
    %72 = vector.multi_reduction <add>, %71, %cst_22 [1] : vector<8x256xf32> to vector<8xf32>
    %73 = vector.shape_cast %72 : vector<8xf32> to vector<8x1xf32>
    %74 = arith.mulf %71, %71 : vector<8x256xf32>
    %cst_23 = arith.constant dense<0.000000e+00> : vector<8xf32>
    %75 = vector.multi_reduction <add>, %74, %cst_23 [1] : vector<8x256xf32> to vector<8xf32>
    %76 = vector.shape_cast %75 : vector<8xf32> to vector<8x1xf32>
    %cst_24 = arith.constant 3.906250e-03 : f32
    %77 = vector.broadcast %cst_24 : f32 to vector<8x1xf32>
    %78 = arith.mulf %73, %77 : vector<8x1xf32>
    %cst_25 = arith.constant 3.906250e-03 : f32
    %79 = vector.broadcast %cst_25 : f32 to vector<8x1xf32>
    %80 = arith.mulf %76, %79 : vector<8x1xf32>
    %81 = arith.mulf %78, %78 : vector<8x1xf32>
    %82 = arith.subf %80, %81 : vector<8x1xf32>
    %83 = vector.broadcast %78 : vector<8x1xf32> to vector<8x256xf32>
    %84 = arith.subf %71, %83 : vector<8x256xf32>
    %cst_26 = arith.constant 9.99999974E-6 : f32
    %85 = vector.broadcast %cst_26 : f32 to vector<8x1xf32>
    %86 = arith.addf %82, %85 : vector<8x1xf32>
    %87 = math.rsqrt %86 : vector<8x1xf32>
    %88 = vector.broadcast %87 : vector<8x1xf32> to vector<8x256xf32>
    %89 = arith.mulf %84, %88 : vector<8x256xf32>
    %c0_27 = arith.constant 0 : index
    %c0_28 = arith.constant 0 : index
    %90 = vector.load %arg10[%c0_27, %c0_28] : memref<8x1xf32, #tpu.memory_space<vmem>>, vector<8x1xf32>
    %91 = vector.broadcast %90 : vector<8x1xf32> to vector<8x256xf32>
    %92 = arith.mulf %89, %91 : vector<8x256xf32>
    %c0_29 = arith.constant 0 : index
    %c0_30 = arith.constant 0 : index
    %93 = vector.load %arg11[%c0_29, %c0_30] : memref<8x1xf32, #tpu.memory_space<vmem>>, vector<8x1xf32>
    %94 = vector.broadcast %93 : vector<8x1xf32> to vector<8x256xf32>
    %95 = arith.addf %92, %94 : vector<8x256xf32>
    %cst_31 = arith.constant 0.000000e+00 : f32
    %96 = vector.broadcast %cst_31 : f32 to vector<8x256xf32>
    %97 = arith.subf %96, %95 : vector<8x256xf32>
    %98 = math.exp %97 : vector<8x256xf32>
    %cst_32 = arith.constant 1.000000e+00 : f32
    %99 = vector.broadcast %cst_32 : f32 to vector<8x256xf32>
    %100 = arith.addf %99, %98 : vector<8x256xf32>
    %cst_33 = arith.constant 1.000000e+00 : f32
    %101 = vector.broadcast %cst_33 : f32 to vector<8x256xf32>
    %102 = arith.divf %101, %100 : vector<8x256xf32>
    %103 = arith.mulf %95, %102 : vector<8x256xf32>
    %104 = vector.extract_strided_slice %103 {offsets = [0, 239], sizes = [8, 17], strides = [1, 1]} : vector<8x256xf32> to vector<8x17xf32>
    %105 = vector.extract_strided_slice %103 {offsets = [0, 0], sizes = [8, 239], strides = [1, 1]} : vector<8x256xf32> to vector<8x239xf32>
    %106 = tpu.concatenate %104, %105 in 1 : vector<8x17xf32>, vector<8x239xf32> -> vector<8x256xf32>
    %107 = vector.extract_strided_slice %3 {offsets = [0, 0], sizes = [1, 256], strides = [1, 1]} : vector<9x256xf32> to vector<1x256xf32>
    %108 = vector.broadcast %107 : vector<1x256xf32> to vector<8x256xf32>
    %109 = arith.mulf %106, %108 : vector<8x256xf32>
    %110 = vector.extract_strided_slice %103 {offsets = [0, 240], sizes = [8, 16], strides = [1, 1]} : vector<8x256xf32> to vector<8x16xf32>
    %111 = vector.extract_strided_slice %103 {offsets = [0, 0], sizes = [8, 240], strides = [1, 1]} : vector<8x256xf32> to vector<8x240xf32>
    %112 = tpu.concatenate %110, %111 in 1 : vector<8x16xf32>, vector<8x240xf32> -> vector<8x256xf32>
    %113 = vector.extract_strided_slice %3 {offsets = [1, 0], sizes = [1, 256], strides = [1, 1]} : vector<9x256xf32> to vector<1x256xf32>
    %114 = vector.broadcast %113 : vector<1x256xf32> to vector<8x256xf32>
    %115 = arith.mulf %112, %114 : vector<8x256xf32>
    %116 = vector.extract_strided_slice %103 {offsets = [0, 241], sizes = [8, 15], strides = [1, 1]} : vector<8x256xf32> to vector<8x15xf32>
    %117 = vector.extract_strided_slice %103 {offsets = [0, 0], sizes = [8, 241], strides = [1, 1]} : vector<8x256xf32> to vector<8x241xf32>
    %118 = tpu.concatenate %116, %117 in 1 : vector<8x15xf32>, vector<8x241xf32> -> vector<8x256xf32>
    %119 = vector.extract_strided_slice %3 {offsets = [2, 0], sizes = [1, 256], strides = [1, 1]} : vector<9x256xf32> to vector<1x256xf32>
    %120 = vector.broadcast %119 : vector<1x256xf32> to vector<8x256xf32>
    %121 = arith.mulf %118, %120 : vector<8x256xf32>
    %122 = vector.extract_strided_slice %103 {offsets = [0, 255], sizes = [8, 1], strides = [1, 1]} : vector<8x256xf32> to vector<8x1xf32>
    %123 = vector.extract_strided_slice %103 {offsets = [0, 0], sizes = [8, 255], strides = [1, 1]} : vector<8x256xf32> to vector<8x255xf32>
    %124 = tpu.concatenate %122, %123 in 1 : vector<8x1xf32>, vector<8x255xf32> -> vector<8x256xf32>
    %125 = vector.extract_strided_slice %3 {offsets = [3, 0], sizes = [1, 256], strides = [1, 1]} : vector<9x256xf32> to vector<1x256xf32>
    %126 = vector.broadcast %125 : vector<1x256xf32> to vector<8x256xf32>
    %127 = arith.mulf %124, %126 : vector<8x256xf32>
    %128 = vector.extract_strided_slice %3 {offsets = [4, 0], sizes = [1, 256], strides = [1, 1]} : vector<9x256xf32> to vector<1x256xf32>
    %129 = vector.broadcast %128 : vector<1x256xf32> to vector<8x256xf32>
    %130 = arith.mulf %103, %129 : vector<8x256xf32>
    %131 = vector.extract_strided_slice %103 {offsets = [0, 1], sizes = [8, 255], strides = [1, 1]} : vector<8x256xf32> to vector<8x255xf32>
    %132 = vector.extract_strided_slice %103 {offsets = [0, 0], sizes = [8, 1], strides = [1, 1]} : vector<8x256xf32> to vector<8x1xf32>
    %133 = tpu.concatenate %131, %132 in 1 : vector<8x255xf32>, vector<8x1xf32> -> vector<8x256xf32>
    %134 = vector.extract_strided_slice %3 {offsets = [5, 0], sizes = [1, 256], strides = [1, 1]} : vector<9x256xf32> to vector<1x256xf32>
    %135 = vector.broadcast %134 : vector<1x256xf32> to vector<8x256xf32>
    %136 = arith.mulf %133, %135 : vector<8x256xf32>
    %137 = vector.extract_strided_slice %103 {offsets = [0, 15], sizes = [8, 241], strides = [1, 1]} : vector<8x256xf32> to vector<8x241xf32>
    %138 = vector.extract_strided_slice %103 {offsets = [0, 0], sizes = [8, 15], strides = [1, 1]} : vector<8x256xf32> to vector<8x15xf32>
    %139 = tpu.concatenate %137, %138 in 1 : vector<8x241xf32>, vector<8x15xf32> -> vector<8x256xf32>
    %140 = vector.extract_strided_slice %3 {offsets = [6, 0], sizes = [1, 256], strides = [1, 1]} : vector<9x256xf32> to vector<1x256xf32>
    %141 = vector.broadcast %140 : vector<1x256xf32> to vector<8x256xf32>
    %142 = arith.mulf %139, %141 : vector<8x256xf32>
    %143 = vector.extract_strided_slice %103 {offsets = [0, 16], sizes = [8, 240], strides = [1, 1]} : vector<8x256xf32> to vector<8x240xf32>
    %144 = vector.extract_strided_slice %103 {offsets = [0, 0], sizes = [8, 16], strides = [1, 1]} : vector<8x256xf32> to vector<8x16xf32>
    %145 = tpu.concatenate %143, %144 in 1 : vector<8x240xf32>, vector<8x16xf32> -> vector<8x256xf32>
    %146 = vector.extract_strided_slice %3 {offsets = [7, 0], sizes = [1, 256], strides = [1, 1]} : vector<9x256xf32> to vector<1x256xf32>
    %147 = vector.broadcast %146 : vector<1x256xf32> to vector<8x256xf32>
    %148 = arith.mulf %145, %147 : vector<8x256xf32>
    %149 = vector.extract_strided_slice %103 {offsets = [0, 17], sizes = [8, 239], strides = [1, 1]} : vector<8x256xf32> to vector<8x239xf32>
    %150 = vector.extract_strided_slice %103 {offsets = [0, 0], sizes = [8, 17], strides = [1, 1]} : vector<8x256xf32> to vector<8x17xf32>
    %151 = tpu.concatenate %149, %150 in 1 : vector<8x239xf32>, vector<8x17xf32> -> vector<8x256xf32>
    %152 = vector.extract_strided_slice %3 {offsets = [8, 0], sizes = [1, 256], strides = [1, 1]} : vector<9x256xf32> to vector<1x256xf32>
    %153 = vector.broadcast %152 : vector<1x256xf32> to vector<8x256xf32>
    %154 = arith.mulf %151, %153 : vector<8x256xf32>
    %155 = tpu.concatenate %109, %115, %121, %127, %130, %136, %142, %148, %154 in 0 : vector<8x256xf32>, vector<8x256xf32>, vector<8x256xf32>, vector<8x256xf32>, vector<8x256xf32>, vector<8x256xf32>, vector<8x256xf32>, vector<8x256xf32>, vector<8x256xf32> -> vector<72x256xf32>
    %c0_34 = arith.constant 0 : index
    %c0_35 = arith.constant 0 : index
    %156 = vector.load %arg12[%c0_34, %c0_35] : memref<8x72xf32, #tpu.memory_space<vmem>>, vector<8x72xf32>
    %cst_36 = arith.constant dense<0.000000e+00> : vector<8x256xf32>
    %157 = tpu.matmul %156, %155, %cst_36 {dimension_numbers = #tpu.dot_dimension_numbers<[1], [0], [0], [1], [0, 0, 1, 1], [], []>} : vector<8x72xf32>, vector<72x256xf32>, vector<8x256xf32> -> vector<8x256xf32>
    %c0_37 = arith.constant 0 : index
    %c0_38 = arith.constant 0 : index
    %158 = vector.load %arg13[%c0_37, %c0_38] : memref<8x1xf32, #tpu.memory_space<vmem>>, vector<8x1xf32>
    %159 = vector.broadcast %158 : vector<8x1xf32> to vector<8x256xf32>
    %160 = arith.addf %157, %159 : vector<8x256xf32>
    %cst_39 = arith.constant dense<0.000000e+00> : vector<8xf32>
    %161 = vector.multi_reduction <add>, %160, %cst_39 [1] : vector<8x256xf32> to vector<8xf32>
    %162 = vector.shape_cast %161 : vector<8xf32> to vector<8x1xf32>
    %163 = arith.mulf %160, %160 : vector<8x256xf32>
    %cst_40 = arith.constant dense<0.000000e+00> : vector<8xf32>
    %164 = vector.multi_reduction <add>, %163, %cst_40 [1] : vector<8x256xf32> to vector<8xf32>
    %165 = vector.shape_cast %164 : vector<8xf32> to vector<8x1xf32>
    %cst_41 = arith.constant 3.906250e-03 : f32
    %166 = vector.broadcast %cst_41 : f32 to vector<8x1xf32>
    %167 = arith.mulf %162, %166 : vector<8x1xf32>
    %cst_42 = arith.constant 3.906250e-03 : f32
    %168 = vector.broadcast %cst_42 : f32 to vector<8x1xf32>
    %169 = arith.mulf %165, %168 : vector<8x1xf32>
    %170 = arith.mulf %167, %167 : vector<8x1xf32>
    %171 = arith.subf %169, %170 : vector<8x1xf32>
    %172 = vector.broadcast %167 : vector<8x1xf32> to vector<8x256xf32>
    %173 = arith.subf %160, %172 : vector<8x256xf32>
    %cst_43 = arith.constant 9.99999974E-6 : f32
    %174 = vector.broadcast %cst_43 : f32 to vector<8x1xf32>
    %175 = arith.addf %171, %174 : vector<8x1xf32>
    %176 = math.rsqrt %175 : vector<8x1xf32>
    %177 = vector.broadcast %176 : vector<8x1xf32> to vector<8x256xf32>
    %178 = arith.mulf %173, %177 : vector<8x256xf32>
    %c0_44 = arith.constant 0 : index
    %c0_45 = arith.constant 0 : index
    %179 = vector.load %arg14[%c0_44, %c0_45] : memref<8x1xf32, #tpu.memory_space<vmem>>, vector<8x1xf32>
    %180 = vector.broadcast %179 : vector<8x1xf32> to vector<8x256xf32>
    %181 = arith.mulf %178, %180 : vector<8x256xf32>
    %c0_46 = arith.constant 0 : index
    %c0_47 = arith.constant 0 : index
    %182 = vector.load %arg15[%c0_46, %c0_47] : memref<8x1xf32, #tpu.memory_space<vmem>>, vector<8x1xf32>
    %183 = vector.broadcast %182 : vector<8x1xf32> to vector<8x256xf32>
    %184 = arith.addf %181, %183 : vector<8x256xf32>
    %cst_48 = arith.constant 0.000000e+00 : f32
    %185 = vector.broadcast %cst_48 : f32 to vector<8x256xf32>
    %186 = arith.subf %185, %184 : vector<8x256xf32>
    %187 = math.exp %186 : vector<8x256xf32>
    %cst_49 = arith.constant 1.000000e+00 : f32
    %188 = vector.broadcast %cst_49 : f32 to vector<8x256xf32>
    %189 = arith.addf %188, %187 : vector<8x256xf32>
    %cst_50 = arith.constant 1.000000e+00 : f32
    %190 = vector.broadcast %cst_50 : f32 to vector<8x256xf32>
    %191 = arith.divf %190, %189 : vector<8x256xf32>
    %192 = arith.mulf %184, %191 : vector<8x256xf32>
    %193 = arith.addf %192, %14 : vector<8x256xf32>
    %c0_51 = arith.constant 0 : index
    %c0_52 = arith.constant 0 : index
    %c0_53 = arith.constant 0 : index
    %194 = vector.load %arg16[%c0_51, %c0_52, %c0_53] : memref<1x8x256xf32, #tpu.memory_space<vmem>>, vector<1x8x256xf32>
    %195 = vector.shape_cast %194 : vector<1x8x256xf32> to vector<8x256xf32>
    %196 = vector.shape_cast %193 : vector<8x256xf32> to vector<1x8x256xf32>
    tpu.vector_store %arg16[%c0_51, %c0_52, %c0_53], %196 {strides = array<i32>} : memref<1x8x256xf32, #tpu.memory_space<vmem>>, vector<1x8x256xf32>,
    return
  }
  func.func @transform_0(%arg0: i32) -> (i32, i32, i32) {
    %c0_i32 = arith.constant 0 : i32
    %c0_i32_0 = arith.constant 0 : i32
    %c0_i32_1 = arith.constant 0 : i32
    return %arg0, %c0_i32, %c0_i32_0 : i32, i32, i32
  }
  func.func @transform_1(%arg0: i32) -> (i32, i32) {
    %c0_i32 = arith.constant 0 : i32
    %c0_i32_0 = arith.constant 0 : i32
    %c0_i32_1 = arith.constant 0 : i32
    return %c0_i32, %c0_i32_0 : i32, i32
  }
  func.func @transform_2(%arg0: i32) -> (i32, i32) {
    %c0_i32 = arith.constant 0 : i32
    %c0_i32_0 = arith.constant 0 : i32
    %c0_i32_1 = arith.constant 0 : i32
    return %c0_i32, %c0_i32_0 : i32, i32
  }
  func.func @transform_3(%arg0: i32) -> (i32, i32) {
    %c0_i32 = arith.constant 0 : i32
    %c0_i32_0 = arith.constant 0 : i32
    %c0_i32_1 = arith.constant 0 : i32
    return %c0_i32, %c0_i32_0 : i32, i32
  }
  func.func @transform_4(%arg0: i32) -> (i32, i32) {
    %c0_i32 = arith.constant 0 : i32
    %c0_i32_0 = arith.constant 0 : i32
    %c0_i32_1 = arith.constant 0 : i32
    return %c0_i32, %c0_i32_0 : i32, i32
  }
  func.func @transform_5(%arg0: i32) -> (i32, i32) {
    %c0_i32 = arith.constant 0 : i32
    %c0_i32_0 = arith.constant 0 : i32
    %c0_i32_1 = arith.constant 0 : i32
    return %c0_i32, %c0_i32_0 : i32, i32
  }
  func.func @transform_6(%arg0: i32) -> (i32, i32) {
    %c0_i32 = arith.constant 0 : i32
    %c0_i32_0 = arith.constant 0 : i32
    %c0_i32_1 = arith.constant 0 : i32
    return %c0_i32, %c0_i32_0 : i32, i32
  }
  func.func @transform_7(%arg0: i32) -> (i32, i32) {
    %c0_i32 = arith.constant 0 : i32
    %c0_i32_0 = arith.constant 0 : i32
    %c0_i32_1 = arith.constant 0 : i32
    return %c0_i32, %c0_i32_0 : i32, i32
  }
  func.func @transform_8(%arg0: i32) -> (i32, i32) {
    %c0_i32 = arith.constant 0 : i32
    %c0_i32_0 = arith.constant 0 : i32
    %c0_i32_1 = arith.constant 0 : i32
    return %c0_i32, %c0_i32_0 : i32, i32
  }
  func.func @transform_9(%arg0: i32) -> (i32, i32) {
    %c0_i32 = arith.constant 0 : i32
    %c0_i32_0 = arith.constant 0 : i32
    %c0_i32_1 = arith.constant 0 : i32
    return %c0_i32, %c0_i32_0 : i32, i32
  }
  func.func @transform_10(%arg0: i32) -> (i32, i32) {
    %c0_i32 = arith.constant 0 : i32
    %c0_i32_0 = arith.constant 0 : i32
    %c0_i32_1 = arith.constant 0 : i32
    return %c0_i32, %c0_i32_0 : i32, i32
  }
  func.func @transform_11(%arg0: i32) -> (i32, i32) {
    %c0_i32 = arith.constant 0 : i32
    %c0_i32_0 = arith.constant 0 : i32
    %c0_i32_1 = arith.constant 0 : i32
    return %c0_i32, %c0_i32_0 : i32, i32
  }
  func.func @transform_12(%arg0: i32) -> (i32, i32) {
    %c0_i32 = arith.constant 0 : i32
    %c0_i32_0 = arith.constant 0 : i32
    %c0_i32_1 = arith.constant 0 : i32
    return %c0_i32, %c0_i32_0 : i32, i32
  }
  func.func @transform_13(%arg0: i32) -> (i32, i32) {
    %c0_i32 = arith.constant 0 : i32
    %c0_i32_0 = arith.constant 0 : i32
    %c0_i32_1 = arith.constant 0 : i32
    return %c0_i32, %c0_i32_0 : i32, i32
  }
  func.func @transform_14(%arg0: i32) -> (i32, i32) {
    %c0_i32 = arith.constant 0 : i32
    %c0_i32_0 = arith.constant 0 : i32
    %c0_i32_1 = arith.constant 0 : i32
    return %c0_i32, %c0_i32_0 : i32, i32
  }
  func.func @transform_15(%arg0: i32) -> (i32, i32, i32) {
    %c0_i32 = arith.constant 0 : i32
    %c0_i32_0 = arith.constant 0 : i32
    %c0_i32_1 = arith.constant 0 : i32
    return %arg0, %c0_i32, %c0_i32_0 : i32, i32, i32
  }
}

</mosaic_0001>

<llo_original>
// kernel: _lambda_.1
$region0: #{_lambda_.1}
  #allocation0 [shape = 'u32[]', space=smem, size = 0x4, offset = 0x4, fixed_abs, tag = 'smem constant byte address 0x4 - core index']
  #allocation1 [shape = 'u32[144,128]{1,0:T(1,128)}', space=vmem, size = 0x12000, scoped, tag = 'internal scratch']
  %s0 = inlined_call_operand.vmem [shape: f32[2,8,256], index: 0, kind: input, shape index: {}]
  %s1 = inlined_call_operand.vmem [shape: f32[8,256], index: 1, kind: input, shape index: {}]
  %s2 = inlined_call_operand.hbm [shape: f32[256,256], index: 2, kind: input, shape index: {}]
  %s3 = inlined_call_operand.hbm [shape: f32[256,256], index: 3, kind: input, shape index: {}]
  %s4 = inlined_call_operand.hbm [shape: f32[256,256], index: 4, kind: input, shape index: {}]
  %s5 = inlined_call_operand.hbm [shape: f32[256,256], index: 5, kind: input, shape index: {}]
  %s6 = inlined_call_operand.vmem [shape: f32[9,256], index: 6, kind: input, shape index: {}]
  %s7 = inlined_call_operand.vmem [shape: f32[8,72], index: 7, kind: input, shape index: {}]
  %s8 = inlined_call_operand.vmem [shape: f32[8,1], index: 8, kind: input, shape index: {}]
  %s9 = inlined_call_operand.vmem [shape: f32[8,1], index: 9, kind: input, shape index: {}, may-alias: {9,13}]
  %s10 = inlined_call_operand.vmem [shape: f32[8,1], index: 10, kind: input, shape index: {}, may-alias: {10,14}]
  %s11 = inlined_call_operand.vmem [shape: f32[8,72], index: 11, kind: input, shape index: {}]
  %s12 = inlined_call_operand.vmem [shape: f32[8,1], index: 12, kind: input, shape index: {}]
  %s13 = inlined_call_operand.vmem [shape: f32[8,1], index: 13, kind: input, shape index: {}, may-alias: {9,13}]
  %s14 = inlined_call_operand.vmem [shape: f32[8,1], index: 14, kind: input, shape index: {}, may-alias: {10,14}]
  %s15 = inlined_call_operand.vmem [shape: f32[2,8,256], index: 15, kind: output, shape index: {}]
  %s16 = sld [smem:[#allocation0]]
  $region109: #{_lambda_.1} parent=0
    _
  %s18 = ssub.s32 1, %s16
  %s19 = scalar_select 0, %s18, %s16
  $region1: #{_lambda_.1} parent=0
    #allocation2 [shape = 'u8[262144]{0}', space=vmem, size = 0x40000, scoped, tag = 'input window, operand 2, single buffered']
    #allocation3 [shape = 's32[2]{0}', space=sflag, size = 0x8, scoped, tag = 'scoped memory for _lambda_.1']
    #allocation4 [shape = 'u8[262144]{0}', space=vmem, size = 0x40000, scoped, tag = 'input window, operand 3, single buffered']
    #allocation5 [shape = 's32[1]{0}', space=sflag, size = 0x4, scoped, tag = 'scoped memory for _lambda_.1']
    #allocation6 [shape = 'u8[262144]{0}', space=vmem, size = 0x40000, scoped, tag = 'input window, operand 4, single buffered']
    #allocation7 [shape = 'u8[262144]{0}', space=vmem, size = 0x40000, scoped, tag = 'input window, operand 5, single buffered']
    #allocation8 [shape = 's32[1]{0}', space=sflag, size = 0x4, scoped, tag = 'scoped memory for _lambda_.1']
    %20 = vsyncpa [#allocation3], 0
    %21 = vsyncpa [#allocation5], 0
    %22 = vsyncpa [#allocation8], 0
    loop: start=0, step=1, limit=4
    $region2: #{_lambda_.1} parent=1 // loop_pre_header
      _
    $region3: #{_lambda_.1} parent=1 // loop_header
      %s24 = sphi 0, %s28
      %p25 = scmp.ge.s32.totalorder %s24, 4
      %s34 = sphi 0, %s36
      %s37 = sphi 0, %s34
      %s38 = sphi 0, %s37
      %s54 = sphi 0, %s38
      %s58 = sphi 0, %s58
      %s60 = sphi 0, %s58
      %s61 = sphi 0, %s60
      %s75 = sphi 0, %s61
      %s79 = sphi 0, %s79
      %s81 = sphi 0, %s79
      %s82 = sphi 0, %s81
      %s96 = sphi 0, %s82
      %s100 = sphi 0, %s100
      %s102 = sphi 0, %s100
      %s103 = sphi 0, %s102
      %s117 = sphi 0, %s103
      %s121 = sphi 0, %s121
      %s123 = sphi 0, %s121
      %s124 = sphi 0, %s123
      %s138 = sphi 0, %s124
      %s142 = sphi 0, %s142
      %s144 = sphi 0, %s142
      %s145 = sphi 0, %s144
      %s159 = sphi 0, %s145
      %s163 = sphi 0, %s163
      %s165 = sphi 0, %s163
      %s166 = sphi 0, %s165
      %s180 = sphi 0, %s166
      %s184 = sphi 0, %s184
      %s186 = sphi 0, %s184
      %s187 = sphi 0, %s186
      %s201 = sphi 0, %s187
      %s205 = sphi 0, %s205
      %s207 = sphi 0, %s205
      %s208 = sphi 0, %s207
      %s222 = sphi 0, %s208
      %s226 = sphi 0, %s226
      %s228 = sphi 0, %s226
      %s229 = sphi 0, %s228
      %s243 = sphi 0, %s229
      %s247 = sphi 0, %s247
      %s249 = sphi 0, %s247
      %s250 = sphi 0, %s249
      %s264 = sphi 0, %s250
      %s268 = sphi 0, %s268
      %s270 = sphi 0, %s268
      %s271 = sphi 0, %s270
      %s285 = sphi 0, %s271
      %s289 = sphi 0, %s289
      %s291 = sphi 0, %s289
      %s292 = sphi 0, %s291
      %s306 = sphi 0, %s292
      %s310 = sphi 0, %s310
      %s312 = sphi 0, %s310
      %s313 = sphi 0, %s312
      %s327 = sphi 0, %s313
      %s331 = sphi 0, %s331
      %s333 = sphi 0, %s331
      %s334 = sphi 0, %s333
      %s348 = sphi 0, %s334
      %s354 = sphi 0, %s356
      %s357 = sphi 0, %s354
      %s358 = sphi 0, %s357
      %s374 = sphi 0, %s358
    $region4: #{_lambda_.1} parent=1 // loop_header_branch
      %27 = sbr.rel (%p25) target = $region8
    $region5: #{_lambda_.1} parent=1 // loop_body
      %s29 = ssub.s32 %s24, 1
      %s30 = ssub.s32 %s24, 2
      %s31 = sadd.s32 %s24, 1
      %s32 = ssub.s32 %s24, %s31
      %p33 = scmp.eq.s32.totalorder %s32, 0
      %s35 = sadd.s32 %s34, 1
      %s36 = scalar_select %p33, %s34, %s35
      %p39 = pneg %p33
      %p40 = scmp.eq.s32.totalorder %s24, 1
      %p41 = por %p39, %p40
      %p42 = scmp.ne.s32.totalorder %s34, %s37
      %p43 = scmp.eq.s32.totalorder %s24, 0
      %p44 = por %p42, %p43
      %p45 = scmp.ne.s32.totalorder %s34, %s37
      %p46 = scmp.eq.s32.totalorder %s29, 1
      %p47 = por %p45, %p46
      %p48 = scmp.ne.s32.totalorder %s37, %s38
      %p49 = scmp.eq.s32.totalorder %s29, 0
      %p50 = por %p48, %p49
      %p51 = scmp.ne.s32.totalorder %s37, %s38
      %p52 = scmp.eq.s32.totalorder %s30, 1
      %p53 = por %p51, %p52
      %p55 = scmp.ne.s32.totalorder %s38, %s54
      %p56 = scmp.eq.s32.totalorder %s30, 0
      %p57 = por %p55, %p56
      %s59 = sadd.s32 %s58, 1
      %p62 = scmp.eq.s32.totalorder %s24, 1
      %p63 = scmp.ne.s32.totalorder %s58, %s60
      %p64 = scmp.eq.s32.totalorder %s24, 0
      %p65 = por %p63, %p64
      %p66 = scmp.ne.s32.totalorder %s58, %s60
      %p67 = scmp.eq.s32.totalorder %s29, 1
      %p68 = por %p66, %p67
      %p69 = scmp.ne.s32.totalorder %s60, %s61
      %p70 = scmp.eq.s32.totalorder %s29, 0
      %p71 = por %p69, %p70
      %p72 = scmp.ne.s32.totalorder %s60, %s61
      %p73 = scmp.eq.s32.totalorder %s30, 1
      %p74 = por %p72, %p73
      %p76 = scmp.ne.s32.totalorder %s61, %s75
      %p77 = scmp.eq.s32.totalorder %s30, 0
      %p78 = por %p76, %p77
      %s80 = sadd.s32 %s79, 1
      %p83 = scmp.eq.s32.totalorder %s24, 1
      %p84 = scmp.ne.s32.totalorder %s79, %s81
      %p85 = scmp.eq.s32.totalorder %s24, 0
      %p86 = por %p84, %p85
      %p87 = scmp.ne.s32.totalorder %s79, %s81
      %p88 = scmp.eq.s32.totalorder %s29, 1
      %p89 = por %p87, %p88
      %p90 = scmp.ne.s32.totalorder %s81, %s82
      %p91 = scmp.eq.s32.totalorder %s29, 0
      %p92 = por %p90, %p91
      %p93 = scmp.ne.s32.totalorder %s81, %s82
      %p94 = scmp.eq.s32.totalorder %s30, 1
      %p95 = por %p93, %p94
      %p97 = scmp.ne.s32.totalorder %s82, %s96
      %p98 = scmp.eq.s32.totalorder %s30, 0
      %p99 = por %p97, %p98
      %s101 = sadd.s32 %s100, 1
      %p104 = scmp.eq.s32.totalorder %s24, 1
      %p105 = scmp.ne.s32.totalorder %s100, %s102
      %p106 = scmp.eq.s32.totalorder %s24, 0
      %p107 = por %p105, %p106
      %p108 = scmp.ne.s32.totalorder %s100, %s102
      %p109 = scmp.eq.s32.totalorder %s29, 1
      %p110 = por %p108, %p109
      %p111 = scmp.ne.s32.totalorder %s102, %s103
      %p112 = scmp.eq.s32.totalorder %s29, 0
      %p113 = por %p111, %p112
      %p114 = scmp.ne.s32.totalorder %s102, %s103
      %p115 = scmp.eq.s32.totalorder %s30, 1
      %p116 = por %p114, %p115
      %p118 = scmp.ne.s32.totalorder %s103, %s117
      %p119 = scmp.eq.s32.totalorder %s30, 0
      %p120 = por %p118, %p119
      %s122 = sadd.s32 %s121, 1
      %p125 = scmp.eq.s32.totalorder %s24, 1
      %p126 = scmp.ne.s32.totalorder %s121, %s123
      %p127 = scmp.eq.s32.totalorder %s24, 0
      %p128 = por %p126, %p127
      %p129 = scmp.ne.s32.totalorder %s121, %s123
      %p130 = scmp.eq.s32.totalorder %s29, 1
      %p131 = por %p129, %p130
      %p132 = scmp.ne.s32.totalorder %s123, %s124
      %p133 = scmp.eq.s32.totalorder %s29, 0
      %p134 = por %p132, %p133
      %p135 = scmp.ne.s32.totalorder %s123, %s124
      %p136 = scmp.eq.s32.totalorder %s30, 1
      %p137 = por %p135, %p136
      %p139 = scmp.ne.s32.totalorder %s124, %s138
      %p140 = scmp.eq.s32.totalorder %s30, 0
      %p141 = por %p139, %p140
      %s143 = sadd.s32 %s142, 1
      %p146 = scmp.eq.s32.totalorder %s24, 1
      %p147 = scmp.ne.s32.totalorder %s142, %s144
      %p148 = scmp.eq.s32.totalorder %s24, 0
      %p149 = por %p147, %p148
      %p150 = scmp.ne.s32.totalorder %s142, %s144
      %p151 = scmp.eq.s32.totalorder %s29, 1
      %p152 = por %p150, %p151
      %p153 = scmp.ne.s32.totalorder %s144, %s145
      %p154 = scmp.eq.s32.totalorder %s29, 0
      %p155 = por %p153, %p154
      %p156 = scmp.ne.s32.totalorder %s144, %s145
      %p157 = scmp.eq.s32.totalorder %s30, 1
      %p158 = por %p156, %p157
      %p160 = scmp.ne.s32.totalorder %s145, %s159
      %p161 = scmp.eq.s32.totalorder %s30, 0
      %p162 = por %p160, %p161
      %s164 = sadd.s32 %s163, 1
      %p167 = scmp.eq.s32.totalorder %s24, 1
      %p168 = scmp.ne.s32.totalorder %s163, %s165
      %p169 = scmp.eq.s32.totalorder %s24, 0
      %p170 = por %p168, %p169
      %p171 = scmp.ne.s32.totalorder %s163, %s165
      %p172 = scmp.eq.s32.totalorder %s29, 1
      %p173 = por %p171, %p172
      %p174 = scmp.ne.s32.totalorder %s165, %s166
      %p175 = scmp.eq.s32.totalorder %s29, 0
      %p176 = por %p174, %p175
      %p177 = scmp.ne.s32.totalorder %s165, %s166
      %p178 = scmp.eq.s32.totalorder %s30, 1
      %p179 = por %p177, %p178
      %p181 = scmp.ne.s32.totalorder %s166, %s180
      %p182 = scmp.eq.s32.totalorder %s30, 0
      %p183 = por %p181, %p182
      %s185 = sadd.s32 %s184, 1
      %p188 = scmp.eq.s32.totalorder %s24, 1
      %p189 = scmp.ne.s32.totalorder %s184, %s186
      %p190 = scmp.eq.s32.totalorder %s24, 0
      %p191 = por %p189, %p190
      %p192 = scmp.ne.s32.totalorder %s184, %s186
      %p193 = scmp.eq.s32.totalorder %s29, 1
      %p194 = por %p192, %p193
      %p195 = scmp.ne.s32.totalorder %s186, %s187
      %p196 = scmp.eq.s32.totalorder %s29, 0
      %p197 = por %p195, %p196
      %p198 = scmp.ne.s32.totalorder %s186, %s187
      %p199 = scmp.eq.s32.totalorder %s30, 1
      %p200 = por %p198, %p199
      %p202 = scmp.ne.s32.totalorder %s187, %s201
      %p203 = scmp.eq.s32.totalorder %s30, 0
      %p204 = por %p202, %p203
      %s206 = sadd.s32 %s205, 1
      %p209 = scmp.eq.s32.totalorder %s24, 1
      %p210 = scmp.ne.s32.totalorder %s205, %s207
      %p211 = scmp.eq.s32.totalorder %s24, 0
      %p212 = por %p210, %p211
      %p213 = scmp.ne.s32.totalorder %s205, %s207
      %p214 = scmp.eq.s32.totalorder %s29, 1
      %p215 = por %p213, %p214
      %p216 = scmp.ne.s32.totalorder %s207, %s208
      %p217 = scmp.eq.s32.totalorder %s29, 0
      %p218 = por %p216, %p217
      %p219 = scmp.ne.s32.totalorder %s207, %s208
      %p220 = scmp.eq.s32.totalorder %s30, 1
      %p221 = por %p219, %p220
      %p223 = scmp.ne.s32.totalorder %s208, %s222
      %p224 = scmp.eq.s32.totalorder %s30, 0
      %p225 = por %p223, %p224
      %s227 = sadd.s32 %s226, 1
      %p230 = scmp.eq.s32.totalorder %s24, 1
      %p231 = scmp.ne.s32.totalorder %s226, %s228
      %p232 = scmp.eq.s32.totalorder %s24, 0
      %p233 = por %p231, %p232
      %p234 = scmp.ne.s32.totalorder %s226, %s228
      %p235 = scmp.eq.s32.totalorder %s29, 1
      %p236 = por %p234, %p235
      %p237 = scmp.ne.s32.totalorder %s228, %s229
      %p238 = scmp.eq.s32.totalorder %s29, 0
      %p239 = por %p237, %p238
      %p240 = scmp.ne.s32.totalorder %s228, %s229
      %p241 = scmp.eq.s32.totalorder %s30, 1
      %p242 = por %p240, %p241
      %p244 = scmp.ne.s32.totalorder %s229, %s243
      %p245 = scmp.eq.s32.totalorder %s30, 0
      %p246 = por %p244, %p245
      %s248 = sadd.s32 %s247, 1
      %p251 = scmp.eq.s32.totalorder %s24, 1
      %p252 = scmp.ne.s32.totalorder %s247, %s249
      %p253 = scmp.eq.s32.totalorder %s24, 0
      %p254 = por %p252, %p253
      %p255 = scmp.ne.s32.totalorder %s247, %s249
      %p256 = scmp.eq.s32.totalorder %s29, 1
      %p257 = por %p255, %p256
      %p258 = scmp.ne.s32.totalorder %s249, %s250
      %p259 = scmp.eq.s32.totalorder %s29, 0
      %p260 = por %p258, %p259
      %p261 = scmp.ne.s32.totalorder %s249, %s250
      %p262 = scmp.eq.s32.totalorder %s30, 1
      %p263 = por %p261, %p262
      %p265 = scmp.ne.s32.totalorder %s250, %s264
      %p266 = scmp.eq.s32.totalorder %s30, 0
      %p267 = por %p265, %p266
      %s269 = sadd.s32 %s268, 1
      %p272 = scmp.eq.s32.totalorder %s24, 1
      %p273 = scmp.ne.s32.totalorder %s268, %s270
      %p274 = scmp.eq.s32.totalorder %s24, 0
      %p275 = por %p273, %p274
      %p276 = scmp.ne.s32.totalorder %s268, %s270
      %p277 = scmp.eq.s32.totalorder %s29, 1
      %p278 = por %p276, %p277
      %p279 = scmp.ne.s32.totalorder %s270, %s271
      %p280 = scmp.eq.s32.totalorder %s29, 0
      %p281 = por %p279, %p280
      %p282 = scmp.ne.s32.totalorder %s270, %s271
      %p283 = scmp.eq.s32.totalorder %s30, 1
      %p284 = por %p282, %p283
      %p286 = scmp.ne.s32.totalorder %s271, %s285
      %p287 = scmp.eq.s32.totalorder %s30, 0
      %p288 = por %p286, %p287
      %s290 = sadd.s32 %s289, 1
      %p293 = scmp.eq.s32.totalorder %s24, 1
      %p294 = scmp.ne.s32.totalorder %s289, %s291
      %p295 = scmp.eq.s32.totalorder %s24, 0
      %p296 = por %p294, %p295
      %p297 = scmp.ne.s32.totalorder %s289, %s291
      %p298 = scmp.eq.s32.totalorder %s29, 1
      %p299 = por %p297, %p298
      %p300 = scmp.ne.s32.totalorder %s291, %s292
      %p301 = scmp.eq.s32.totalorder %s29, 0
      %p302 = por %p300, %p301
      %p303 = scmp.ne.s32.totalorder %s291, %s292
      %p304 = scmp.eq.s32.totalorder %s30, 1
      %p305 = por %p303, %p304
      %p307 = scmp.ne.s32.totalorder %s292, %s306
      %p308 = scmp.eq.s32.totalorder %s30, 0
      %p309 = por %p307, %p308
      %s311 = sadd.s32 %s310, 1
      %p314 = scmp.eq.s32.totalorder %s24, 1
      %p315 = scmp.ne.s32.totalorder %s310, %s312
      %p316 = scmp.eq.s32.totalorder %s24, 0
      %p317 = por %p315, %p316
      %p318 = scmp.ne.s32.totalorder %s310, %s312
      %p319 = scmp.eq.s32.totalorder %s29, 1
      %p320 = por %p318, %p319
      %p321 = scmp.ne.s32.totalorder %s312, %s313
      %p322 = scmp.eq.s32.totalorder %s29, 0
      %p323 = por %p321, %p322
      %p324 = scmp.ne.s32.totalorder %s312, %s313
      %p325 = scmp.eq.s32.totalorder %s30, 1
      %p326 = por %p324, %p325
      %p328 = scmp.ne.s32.totalorder %s313, %s327
      %p329 = scmp.eq.s32.totalorder %s30, 0
      %p330 = por %p328, %p329
      %s332 = sadd.s32 %s331, 1
      %p335 = scmp.eq.s32.totalorder %s24, 1
      %p336 = scmp.ne.s32.totalorder %s331, %s333
      %p337 = scmp.eq.s32.totalorder %s24, 0
      %p338 = por %p336, %p337
      %p339 = scmp.ne.s32.totalorder %s331, %s333
      %p340 = scmp.eq.s32.totalorder %s29, 1
      %p341 = por %p339, %p340
      %p342 = scmp.ne.s32.totalorder %s333, %s334
      %p343 = scmp.eq.s32.totalorder %s29, 0
      %p344 = por %p342, %p343
      %p345 = scmp.ne.s32.totalorder %s333, %s334
      %p346 = scmp.eq.s32.totalorder %s30, 1
      %p347 = por %p345, %p346
      %p349 = scmp.ne.s32.totalorder %s334, %s348
      %p350 = scmp.eq.s32.totalorder %s30, 0
      %p351 = por %p349, %p350
      %s352 = ssub.s32 %s24, %s31
      %p353 = scmp.eq.s32.totalorder %s352, 0
      %s355 = sadd.s32 %s354, 1
      %s356 = scalar_select %p353, %s354, %s355
      %p359 = pneg %p353
      %p360 = scmp.eq.s32.totalorder %s24, 1
      %p361 = por %p359, %p360
      %p362 = scmp.ne.s32.totalorder %s354, %s357
      %p363 = scmp.eq.s32.totalorder %s24, 0
      %p364 = por %p362, %p363
      %p365 = scmp.ne.s32.totalorder %s354, %s357
      %p366 = scmp.eq.s32.totalorder %s29, 1
      %p367 = por %p365, %p366
      %p368 = scmp.ne.s32.totalorder %s357, %s358
      %p369 = scmp.eq.s32.totalorder %s29, 0
      %p370 = por %p368, %p369
      %p371 = scmp.ne.s32.totalorder %s357, %s358
      %p372 = scmp.eq.s32.totalorder %s30, 1
      %p373 = por %p371, %p372
      %p375 = scmp.ne.s32.totalorder %s358, %s374
      %p376 = scmp.eq.s32.totalorder %s30, 0
      %p377 = por %p375, %p376
      %p378 = scmp.le.s32.totalorder 1, %s24
      %p379 = scmp.lt.s32.totalorder %s24, 3
      %p380 = pnand %p378, %p379
      %p381 = pneg %p380
      // Predicated region
      $region9: #{_lambda_.1} parent=5 // pred_check
        _
      $region10: #{_lambda_.1} parent=5 // pred_check_branch
        %383 = sbr.rel (%p380) target = $region12
      $region11: #{_lambda_.1} parent=5 // pred_region
        %s384 = ssub.s32 %s24, 1
        // Predicated region
        $region13: #{_lambda_.1} parent=11 // pred_check
          %p385 = pneg %p71
        $region14: #{_lambda_.1} parent=11 // pred_check_branch
          %387 = sbr.rel (%p385) target = $region16
        $region15: #{_lambda_.1} parent=11 // pred_region
          _
        $region16: #{_lambda_.1} parent=11 // pred_fallthru
          _
        // Predicated region
        $region17: #{_lambda_.1} parent=11 // pred_check
          %p388 = pneg %p92
        $region18: #{_lambda_.1} parent=11 // pred_check_branch
          %390 = sbr.rel (%p388) target = $region20
        $region19: #{_lambda_.1} parent=11 // pred_region
          %s392 = ssub.s32 8192, 8192
          %393 = vsyncadd [#allocation3], %s392
          %s394 = sshll.u32 [#allocation2], 4
          %s395 = int_to_ptr.vmem [resolvable:$true] %s394
          %400 = dma.hbm_to_vmem [thread:$0]  %s2, 8192, %s395, [#allocation3], 256, 256, 16
        $region20: #{_lambda_.1} parent=11 // pred_fallthru
          _
        // Predicated region
        $region21: #{_lambda_.1} parent=11 // pred_check
          %p401 = pneg %p113
        $region22: #{_lambda_.1} parent=11 // pred_check_branch
          %403 = sbr.rel (%p401) target = $region24
        $region23: #{_lambda_.1} parent=11 // pred_region
          %s405 = ssub.s32 8192, 8192
          %406 = vsyncadd [#allocation5], %s405
          %s407 = sshll.u32 [#allocation4], 4
          %s408 = int_to_ptr.vmem [resolvable:$true] %s407
          %413 = dma.hbm_to_vmem [thread:$0]  %s3, 8192, %s408, [#allocation5], 256, 256, 16
        $region24: #{_lambda_.1} parent=11 // pred_fallthru
          _
        // Predicated region
        $region25: #{_lambda_.1} parent=11 // pred_check
          %p414 = pneg %p134
        $region26: #{_lambda_.1} parent=11 // pred_check_branch
          %416 = sbr.rel (%p414) target = $region28
        $region27: #{_lambda_.1} parent=11 // pred_region
          %s418 = ssub.s32 8192, 8192
          %419 = vsyncadd [#allocation5], %s418
          %s420 = sshll.u32 [#allocation6], 4
          %s421 = int_to_ptr.vmem [resolvable:$true] %s420
          %426 = dma.hbm_to_vmem [thread:$0]  %s4, 8192, %s421, [#allocation5], 256, 256, 16
        $region28: #{_lambda_.1} parent=11 // pred_fallthru
          _
        // Predicated region
        $region29: #{_lambda_.1} parent=11 // pred_check
          %p427 = pneg %p155
        $region30: #{_lambda_.1} parent=11 // pred_check_branch
          %429 = sbr.rel (%p427) target = $region32
        $region31: #{_lambda_.1} parent=11 // pred_region
          %s431 = ssub.s32 8192, 8192
          %432 = vsyncadd [#allocation8], %s431
          %s433 = sshll.u32 [#allocation7], 4
          %s434 = int_to_ptr.vmem [resolvable:$true] %s433
          %439 = dma.hbm_to_vmem [thread:$0]  %s5, 8192, %s434, [#allocation8], 256, 256, 16
        $region32: #{_lambda_.1} parent=11 // pred_fallthru
          _
        // Predicated region
        $region33: #{_lambda_.1} parent=11 // pred_check
          %p440 = pneg %p176
        $region34: #{_lambda_.1} parent=11 // pred_check_branch
          %442 = sbr.rel (%p440) target = $region36
        $region35: #{_lambda_.1} parent=11 // pred_region
          _
        $region36: #{_lambda_.1} parent=11 // pred_fallthru
          _
        // Predicated region
        $region37: #{_lambda_.1} parent=11 // pred_check
          %p443 = pneg %p197
        $region38: #{_lambda_.1} parent=11 // pred_check_branch
          %445 = sbr.rel (%p443) target = $region40
        $region39: #{_lambda_.1} parent=11 // pred_region
          _
        $region40: #{_lambda_.1} parent=11 // pred_fallthru
          _
        // Predicated region
        $region41: #{_lambda_.1} parent=11 // pred_check
          %p446 = pneg %p218
        $region42: #{_lambda_.1} parent=11 // pred_check_branch
          %448 = sbr.rel (%p446) target = $region44
        $region43: #{_lambda_.1} parent=11 // pred_region
          _
        $region44: #{_lambda_.1} parent=11 // pred_fallthru
          _
        // Predicated region
        $region45: #{_lambda_.1} parent=11 // pred_check
          %p449 = pneg %p239
        $region46: #{_lambda_.1} parent=11 // pred_check_branch
          %451 = sbr.rel (%p449) target = $region48
        $region47: #{_lambda_.1} parent=11 // pred_region
          _
        $region48: #{_lambda_.1} parent=11 // pred_fallthru
          _
        // Predicated region
        $region49: #{_lambda_.1} parent=11 // pred_check
          %p452 = pneg %p260
        $region50: #{_lambda_.1} parent=11 // pred_check_branch
          %454 = sbr.rel (%p452) target = $region52
        $region51: #{_lambda_.1} parent=11 // pred_region
          _
        $region52: #{_lambda_.1} parent=11 // pred_fallthru
          _
        // Predicated region
        $region53: #{_lambda_.1} parent=11 // pred_check
          %p455 = pneg %p281
        $region54: #{_lambda_.1} parent=11 // pred_check_branch
          %457 = sbr.rel (%p455) target = $region56
        $region55: #{_lambda_.1} parent=11 // pred_region
          _
        $region56: #{_lambda_.1} parent=11 // pred_fallthru
          _
        // Predicated region
        $region57: #{_lambda_.1} parent=11 // pred_check
          %p458 = pneg %p302
        $region58: #{_lambda_.1} parent=11 // pred_check_branch
          %460 = sbr.rel (%p458) target = $region60
        $region59: #{_lambda_.1} parent=11 // pred_region
          _
        $region60: #{_lambda_.1} parent=11 // pred_fallthru
          _
        // Predicated region
        $region61: #{_lambda_.1} parent=11 // pred_check
          %p461 = pneg %p323
        $region62: #{_lambda_.1} parent=11 // pred_check_branch
          %463 = sbr.rel (%p461) target = $region64
        $region63: #{_lambda_.1} parent=11 // pred_region
          _
        $region64: #{_lambda_.1} parent=11 // pred_fallthru
          _
        // Predicated region
        $region65: #{_lambda_.1} parent=11 // pred_check
          %p464 = pneg %p344
        $region66: #{_lambda_.1} parent=11 // pred_check_branch
          %466 = sbr.rel (%p464) target = $region68
        $region67: #{_lambda_.1} parent=11 // pred_region
          _
        $region68: #{_lambda_.1} parent=11 // pred_fallthru
          _
      $region12: #{_lambda_.1} parent=5 // pred_fallthru
        _
      %p467 = scmp.lt.s32.totalorder %s24, 2
      // Predicated region
      $region69: #{_lambda_.1} parent=5 // pred_check
        %p468 = pneg %p467
      $region70: #{_lambda_.1} parent=5 // pred_check_branch
        %470 = sbr.rel (%p468) target = $region72
      $region71: #{_lambda_.1} parent=5 // pred_region
        // Predicated region
        $region73: #{_lambda_.1} parent=71 // pred_check
          %p471 = pneg %p44
        $region74: #{_lambda_.1} parent=71 // pred_check_branch
          %473 = sbr.rel (%p471) target = $region76
        $region75: #{_lambda_.1} parent=71 // pred_region
          %p474 = scmp.lt.s32.totalorder %s24, 1
          %s475 = scalar_select %p474, %s24, 1
          %s476 = smul.addr %s475, 2
          %s477 = smul.addr %s476, 8
          %s478 = scalar_lea.vmem %s0, %s477
        $region76: #{_lambda_.1} parent=71 // pred_fallthru
          _
      $region72: #{_lambda_.1} parent=5 // pred_fallthru
        _
      %p479 = scmp.le.s32.totalorder 1, %s24
      %p480 = scmp.lt.s32.totalorder %s24, 3
      %p481 = pnand %p479, %p480
      %p482 = pneg %p481
      // Predicated region
      $region77: #{_lambda_.1} parent=5 // pred_check
        _
      $region78: #{_lambda_.1} parent=5 // pred_check_branch
        %484 = sbr.rel (%p481) target = $region80
      $region79: #{_lambda_.1} parent=5 // pred_region
        %s485 = ssub.s32 %s24, 1
        // Predicated region
        $region81: #{_lambda_.1} parent=79 // pred_check
          %p486 = pneg %p92
        $region82: #{_lambda_.1} parent=79 // pred_check_branch
          %488 = sbr.rel (%p486) target = $region84
        $region83: #{_lambda_.1} parent=79 // pred_region
          %489 = dma.done [#allocation3], 8192
        $region84: #{_lambda_.1} parent=79 // pred_fallthru
          _
        // Predicated region
        $region85: #{_lambda_.1} parent=79 // pred_check
          %p490 = pneg %p113
        $region86: #{_lambda_.1} parent=79 // pred_check_branch
          %492 = sbr.rel (%p490) target = $region88
        $region87: #{_lambda_.1} parent=79 // pred_region
          %493 = dma.done [#allocation5], 8192
        $region88: #{_lambda_.1} parent=79 // pred_fallthru
          _
        // Predicated region
        $region89: #{_lambda_.1} parent=79 // pred_check
          %p494 = pneg %p134
        $region90: #{_lambda_.1} parent=79 // pred_check_branch
          %496 = sbr.rel (%p494) target = $region92
        $region91: #{_lambda_.1} parent=79 // pred_region
          %497 = dma.done [#allocation5], 8192
        $region92: #{_lambda_.1} parent=79 // pred_fallthru
          _
        // Predicated region
        $region93: #{_lambda_.1} parent=79 // pred_check
          %p498 = pneg %p155
        $region94: #{_lambda_.1} parent=79 // pred_check_branch
          %500 = sbr.rel (%p498) target = $region96
        $region95: #{_lambda_.1} parent=79 // pred_region
          %501 = dma.done [#allocation8], 8192
        $region96: #{_lambda_.1} parent=79 // pred_fallthru
          _
        %p502 = scmp.lt.s32.totalorder %s29, 1
        %s503 = scalar_select %p502, %s29, 1
        %s504 = smul.addr %s503, 2
        %s505 = smul.addr %s504, 8
        %s506 = scalar_lea.vmem %s0, %s505
        %p507 = pneg %p50
        %p508 = pneg %p47
        %p509 = pneg %p71
        %p510 = pneg %p68
        %p511 = pneg %p92
        %p512 = pneg %p89
        %p513 = pneg %p113
        %p514 = pneg %p110
        %p515 = pneg %p134
        %p516 = pneg %p131
        %p517 = pneg %p155
        %p518 = pneg %p152
        %p519 = pneg %p176
        %p520 = pneg %p173
        %p521 = pneg %p197
        %p522 = pneg %p194
        %p523 = pneg %p218
        %p524 = pneg %p215
        %p525 = pneg %p239
        %p526 = pneg %p236
        %p527 = pneg %p260
        %p528 = pneg %p257
        %p529 = pneg %p281
        %p530 = pneg %p278
        %p531 = pneg %p302
        %p532 = pneg %p299
        %p533 = pneg %p323
        %p534 = pneg %p320
        %p535 = pneg %p344
        %p536 = pneg %p341
        %p537 = pneg %p370
        %p538 = pneg %p367
        %p539 = scmp.lt.s32.totalorder %s29, 1
        %s540 = scalar_select %p539, %s29, 1
        %s541 = smul.addr %s540, 2
        %s542 = smul.addr %s541, 8
        %s543 = scalar_lea.vmem %s15, %s542
        %p544 = scmp.lt.s32.totalorder %s29, 1
        %s545 = scalar_select %p544, %s29, 1
        %s546 = smul.addr %s545, 2
        %s547 = smul.addr %s546, 8
        %s548 = scalar_lea.vmem %s0, %s547
        %p549 = scmp.lt.s32.totalorder %s29, 1
        %s550 = scalar_select %p549, %s29, 1
        %s551 = smul.addr %s550, 2
        %s552 = smul.addr %s551, 8
        %s553 = scalar_lea.vmem %s15, %s552
        %v554 = vld [vmem:[%s548] sm:$0xff]
        %v555 = vld [vmem:[%s548 + $0x8] sm:$0xff]
        %v556 = vld [vmem:[%s1] sm:$0xff]
        %v557 = vld [vmem:[%s1 + $0x8] sm:$0xff]
        %v558 = vld [vmem:[%s6] sm:$0xff]
        %v559 = vld [vmem:[%s6 + $0x8] sm:$0xff]
        %v560 = vld [vmem:[%s6 + $0x10] sm:$0x1]
        %v561 = vld [vmem:[%s6 + $0x18] sm:$0x1]
        %v562 = vld [vmem:[#allocation2] sm:$0xff]
        %v563 = vld [vmem:[#allocation2 + $0x8] sm:$0xff]
        %v564 = vld [vmem:[#allocation2 + $0x10] sm:$0xff]
        %v565 = vld [vmem:[#allocation2 + $0x18] sm:$0xff]
        %v566 = vld [vmem:[#allocation2 + $0x20] sm:$0xff]
        %v567 = vld [vmem:[#allocation2 + $0x28] sm:$0xff]
        %v568 = vld [vmem:[#allocation2 + $0x30] sm:$0xff]
        %v569 = vld [vmem:[#allocation2 + $0x38] sm:$0xff]
        %v570 = vld [vmem:[#allocation2 + $0x40] sm:$0xff]
        %v571 = vld [vmem:[#allocation2 + $0x48] sm:$0xff]
        %v572 = vld [vmem:[#allocation2 + $0x50] sm:$0xff]
        %v573 = vld [vmem:[#allocation2 + $0x58] sm:$0xff]
        %v574 = vld [vmem:[#allocation2 + $0x60] sm:$0xff]
        %v575 = vld [vmem:[#allocation2 + $0x68] sm:$0xff]
        %v576 = vld [vmem:[#allocation2 + $0x70] sm:$0xff]
        %v577 = vld [vmem:[#allocation2 + $0x78] sm:$0xff]
        %v578 = vld [vmem:[#allocation2 + $0x80] sm:$0xff]
        %v579 = vld [vmem:[#allocation2 + $0x88] sm:$0xff]
        %v580 = vld [vmem:[#allocation2 + $0x90] sm:$0xff]
        %v581 = vld [vmem:[#allocation2 + $0x98] sm:$0xff]
        %v582 = vld [vmem:[#allocation2 + $0xa0] sm:$0xff]
        %v583 = vld [vmem:[#allocation2 + $0xa8] sm:$0xff]
        %v584 = vld [vmem:[#allocation2 + $0xb0] sm:$0xff]
        %v585 = vld [vmem:[#allocation2 + $0xb8] sm:$0xff]
        %v586 = vld [vmem:[#allocation2 + $0xc0] sm:$0xff]
        %v587 = vld [vmem:[#allocation2 + $0xc8] sm:$0xff]
        %v588 = vld [vmem:[#allocation2 + $0xd0] sm:$0xff]
        %v589 = vld [vmem:[#allocation2 + $0xd8] sm:$0xff]
        %v590 = vld [vmem:[#allocation2 + $0xe0] sm:$0xff]
        %v591 = vld [vmem:[#allocation2 + $0xe8] sm:$0xff]
        %v592 = vld [vmem:[#allocation2 + $0xf0] sm:$0xff]
        %v593 = vld [vmem:[#allocation2 + $0xf8] sm:$0xff]
        %v594 = vld [vmem:[#allocation2 + $0x100] sm:$0xff]
        %v595 = vld [vmem:[#allocation2 + $0x108] sm:$0xff]
        %v596 = vld [vmem:[#allocation2 + $0x110] sm:$0xff]
        %v597 = vld [vmem:[#allocation2 + $0x118] sm:$0xff]
        %v598 = vld [vmem:[#allocation2 + $0x120] sm:$0xff]
        %v599 = vld [vmem:[#allocation2 + $0x128] sm:$0xff]
        %v600 = vld [vmem:[#allocation2 + $0x130] sm:$0xff]
        %v601 = vld [vmem:[#allocation2 + $0x138] sm:$0xff]
        %v602 = vld [vmem:[#allocation2 + $0x140] sm:$0xff]
        %v603 = vld [vmem:[#allocation2 + $0x148] sm:$0xff]
        %v604 = vld [vmem:[#allocation2 + $0x150] sm:$0xff]
        %v605 = vld [vmem:[#allocation2 + $0x158] sm:$0xff]
        %v606 = vld [vmem:[#allocation2 + $0x160] sm:$0xff]
        %v607 = vld [vmem:[#allocation2 + $0x168] sm:$0xff]
        %v608 = vld [vmem:[#allocation2 + $0x170] sm:$0xff]
        %v609 = vld [vmem:[#allocation2 + $0x178] sm:$0xff]
        %v610 = vld [vmem:[#allocation2 + $0x180] sm:$0xff]
        %v611 = vld [vmem:[#allocation2 + $0x188] sm:$0xff]
        %v612 = vld [vmem:[#allocation2 + $0x190] sm:$0xff]
        %v613 = vld [vmem:[#allocation2 + $0x198] sm:$0xff]
        %v614 = vld [vmem:[#allocation2 + $0x1a0] sm:$0xff]
        %v615 = vld [vmem:[#allocation2 + $0x1a8] sm:$0xff]
        %v616 = vld [vmem:[#allocation2 + $0x1b0] sm:$0xff]
        %v617 = vld [vmem:[#allocation2 + $0x1b8] sm:$0xff]
        %v618 = vld [vmem:[#allocation2 + $0x1c0] sm:$0xff]
        %v619 = vld [vmem:[#allocation2 + $0x1c8] sm:$0xff]
        %v620 = vld [vmem:[#allocation2 + $0x1d0] sm:$0xff]
        %v621 = vld [vmem:[#allocation2 + $0x1d8] sm:$0xff]
        %v622 = vld [vmem:[#allocation2 + $0x1e0] sm:$0xff]
        %v623 = vld [vmem:[#allocation2 + $0x1e8] sm:$0xff]
        %v624 = vld [vmem:[#allocation2 + $0x1f0] sm:$0xff]
        %v625 = vld [vmem:[#allocation2 + $0x1f8] sm:$0xff]
        %626 = vmatprep.subr.mxu0 %v563
        %627 = vmatpush1.msra.mxu0 %v562
        %628 = vmatprep.subr.mxu0 %v565
        %629 = vmatpush1.msra.mxu0 %v564
        %630 = vmatprep.subr.mxu0 %v567
        %631 = vmatpush1.msra.mxu0 %v566
        %632 = vmatprep.subr.mxu0 %v569
        %633 = vmatpush1.msra.mxu0 %v568
        %634 = vmatprep.subr.mxu0 %v571
        %635 = vmatpush1.msra.mxu0 %v570
        %636 = vmatprep.subr.mxu0 %v573
        %637 = vmatpush1.msra.mxu0 %v572
        %638 = vmatprep.subr.mxu0 %v575
        %639 = vmatpush1.msra.mxu0 %v574
        %640 = vmatprep.subr.mxu0 %v577
        %641 = vmatpush1.msra.mxu0 %v576
        %642 = vmatprep.subr.mxu0 %v579
        %643 = vmatpush1.msra.mxu0 %v578
        %644 = vmatprep.subr.mxu0 %v581
        %645 = vmatpush1.msra.mxu0 %v580
        %646 = vmatprep.subr.mxu0 %v583
        %647 = vmatpush1.msra.mxu0 %v582
        %648 = vmatprep.subr.mxu0 %v585
        %649 = vmatpush1.msra.mxu0 %v584
        %650 = vmatprep.subr.mxu0 %v587
        %651 = vmatpush1.msra.mxu0 %v586
        %652 = vmatprep.subr.mxu0 %v589
        %653 = vmatpush1.msra.mxu0 %v588
        %654 = vmatprep.subr.mxu0 %v591
        %655 = vmatpush1.msra.mxu0 %v590
        %656 = vmatprep.subr.mxu0 %v593
        %657 = vmatpush1.msra.mxu0 %v592
        %658 = vmatprep.subr.mxu0 %v595
        %659 = vmatpush1.msra.mxu0 %v594
        %660 = vmatprep.subr.mxu0 %v597
        %661 = vmatpush1.msra.mxu0 %v596
        %662 = vmatprep.subr.mxu0 %v599
        %663 = vmatpush1.msra.mxu0 %v598
        %664 = vmatprep.subr.mxu0 %v601
        %665 = vmatpush1.msra.mxu0 %v600
        %666 = vmatprep.subr.mxu0 %v603
        %667 = vmatpush1.msra.mxu0 %v602
        %668 = vmatprep.subr.mxu0 %v605
        %669 = vmatpush1.msra.mxu0 %v604
        %670 = vmatprep.subr.mxu0 %v607
        %671 = vmatpush1.msra.mxu0 %v606
        %672 = vmatprep.subr.mxu0 %v609
        %673 = vmatpush1.msra.mxu0 %v608
        %674 = vmatprep.subr.mxu0 %v611
        %675 = vmatpush1.msra.mxu0 %v610
        %676 = vmatprep.subr.mxu0 %v613
        %677 = vmatpush1.msra.mxu0 %v612
        %678 = vmatprep.subr.mxu0 %v615
        %679 = vmatpush1.msra.mxu0 %v614
        %680 = vmatprep.subr.mxu0 %v617
        %681 = vmatpush1.msra.mxu0 %v616
        %682 = vmatprep.subr.mxu0 %v619
        %683 = vmatpush1.msra.mxu0 %v618
        %684 = vmatprep.subr.mxu0 %v621
        %685 = vmatpush1.msra.mxu0 %v620
        %686 = vmatprep.subr.mxu0 %v623
        %687 = vmatpush1.msra.mxu0 %v622
        %688 = vmatprep.subr.mxu0 %v625
        %689 = vmatpush1.msra.mxu0 %v624
        %690 = vmatprep.mubr.f32.mxu0 %v555
        %691 = vmatmul.mubr.f32.gmra.mrb[0].mxu0 %v554
        %v692 = vpop.f32.mrb[0].mxu0
        %v693 = vadd.f32 0.0, %v692
        %v694 = vpop.f32.mrb[0].mxu0
        %v695 = vadd.f32 0.0, %v694
        %696 = vdwg.mxu0
        %v697 = vld [vmem:[#allocation4] sm:$0xff]
        %v698 = vld [vmem:[#allocation4 + $0x8] sm:$0xff]
        %v699 = vld [vmem:[#allocation4 + $0x10] sm:$0xff]
        %v700 = vld [vmem:[#allocation4 + $0x18] sm:$0xff]
        %v701 = vld [vmem:[#allocation4 + $0x20] sm:$0xff]
        %v702 = vld [vmem:[#allocation4 + $0x28] sm:$0xff]
        %v703 = vld [vmem:[#allocation4 + $0x30] sm:$0xff]
        %v704 = vld [vmem:[#allocation4 + $0x38] sm:$0xff]
        %v705 = vld [vmem:[#allocation4 + $0x40] sm:$0xff]
        %v706 = vld [vmem:[#allocation4 + $0x48] sm:$0xff]
        %v707 = vld [vmem:[#allocation4 + $0x50] sm:$0xff]
        %v708 = vld [vmem:[#allocation4 + $0x58] sm:$0xff]
        %v709 = vld [vmem:[#allocation4 + $0x60] sm:$0xff]
        %v710 = vld [vmem:[#allocation4 + $0x68] sm:$0xff]
        %v711 = vld [vmem:[#allocation4 + $0x70] sm:$0xff]
        %v712 = vld [vmem:[#allocation4 + $0x78] sm:$0xff]
        %v713 = vld [vmem:[#allocation4 + $0x80] sm:$0xff]
        %v714 = vld [vmem:[#allocation4 + $0x88] sm:$0xff]
        %v715 = vld [vmem:[#allocation4 + $0x90] sm:$0xff]
        %v716 = vld [vmem:[#allocation4 + $0x98] sm:$0xff]
        %v717 = vld [vmem:[#allocation4 + $0xa0] sm:$0xff]
        %v718 = vld [vmem:[#allocation4 + $0xa8] sm:$0xff]
        %v719 = vld [vmem:[#allocation4 + $0xb0] sm:$0xff]
        %v720 = vld [vmem:[#allocation4 + $0xb8] sm:$0xff]
        %v721 = vld [vmem:[#allocation4 + $0xc0] sm:$0xff]
        %v722 = vld [vmem:[#allocation4 + $0xc8] sm:$0xff]
        %v723 = vld [vmem:[#allocation4 + $0xd0] sm:$0xff]
        %v724 = vld [vmem:[#allocation4 + $0xd8] sm:$0xff]
        %v725 = vld [vmem:[#allocation4 + $0xe0] sm:$0xff]
        %v726 = vld [vmem:[#allocation4 + $0xe8] sm:$0xff]
        %v727 = vld [vmem:[#allocation4 + $0xf0] sm:$0xff]
        %v728 = vld [vmem:[#allocation4 + $0xf8] sm:$0xff]
        %v729 = vld [vmem:[#allocation4 + $0x100] sm:$0xff]
        %v730 = vld [vmem:[#allocation4 + $0x108] sm:$0xff]
        %v731 = vld [vmem:[#allocation4 + $0x110] sm:$0xff]
        %v732 = vld [vmem:[#allocation4 + $0x118] sm:$0xff]
        %v733 = vld [vmem:[#allocation4 + $0x120] sm:$0xff]
        %v734 = vld [vmem:[#allocation4 + $0x128] sm:$0xff]
        %v735 = vld [vmem:[#allocation4 + $0x130] sm:$0xff]
        %v736 = vld [vmem:[#allocation4 + $0x138] sm:$0xff]
        %v737 = vld [vmem:[#allocation4 + $0x140] sm:$0xff]
        %v738 = vld [vmem:[#allocation4 + $0x148] sm:$0xff]
        %v739 = vld [vmem:[#allocation4 + $0x150] sm:$0xff]
        %v740 = vld [vmem:[#allocation4 + $0x158] sm:$0xff]
        %v741 = vld [vmem:[#allocation4 + $0x160] sm:$0xff]
        %v742 = vld [vmem:[#allocation4 + $0x168] sm:$0xff]
        %v743 = vld [vmem:[#allocation4 + $0x170] sm:$0xff]
        %v744 = vld [vmem:[#allocation4 + $0x178] sm:$0xff]
        %v745 = vld [vmem:[#allocation4 + $0x180] sm:$0xff]
        %v746 = vld [vmem:[#allocation4 + $0x188] sm:$0xff]
        %v747 = vld [vmem:[#allocation4 + $0x190] sm:$0xff]
        %v748 = vld [vmem:[#allocation4 + $0x198] sm:$0xff]
        %v749 = vld [vmem:[#allocation4 + $0x1a0] sm:$0xff]
        %v750 = vld [vmem:[#allocation4 + $0x1a8] sm:$0xff]
        %v751 = vld [vmem:[#allocation4 + $0x1b0] sm:$0xff]
        %v752 = vld [vmem:[#allocation4 + $0x1b8] sm:$0xff]
        %v753 = vld [vmem:[#allocation4 + $0x1c0] sm:$0xff]
        %v754 = vld [vmem:[#allocation4 + $0x1c8] sm:$0xff]
        %v755 = vld [vmem:[#allocation4 + $0x1d0] sm:$0xff]
        %v756 = vld [vmem:[#allocation4 + $0x1d8] sm:$0xff]
        %v757 = vld [vmem:[#allocation4 + $0x1e0] sm:$0xff]
        %v758 = vld [vmem:[#allocation4 + $0x1e8] sm:$0xff]
        %v759 = vld [vmem:[#allocation4 + $0x1f0] sm:$0xff]
        %v760 = vld [vmem:[#allocation4 + $0x1f8] sm:$0xff]
        %761 = vmatprep.subr.mxu0 %v698
        %762 = vmatpush1.msra.mxu0 %v697
        %763 = vmatprep.subr.mxu0 %v700
        %764 = vmatpush1.msra.mxu0 %v699
        %765 = vmatprep.subr.mxu0 %v702
        %766 = vmatpush1.msra.mxu0 %v701
        %767 = vmatprep.subr.mxu0 %v704
        %768 = vmatpush1.msra.mxu0 %v703
        %769 = vmatprep.subr.mxu0 %v706
        %770 = vmatpush1.msra.mxu0 %v705
        %771 = vmatprep.subr.mxu0 %v708
        %772 = vmatpush1.msra.mxu0 %v707
        %773 = vmatprep.subr.mxu0 %v710
        %774 = vmatpush1.msra.mxu0 %v709
        %775 = vmatprep.subr.mxu0 %v712
        %776 = vmatpush1.msra.mxu0 %v711
        %777 = vmatprep.subr.mxu0 %v714
        %778 = vmatpush1.msra.mxu0 %v713
        %779 = vmatprep.subr.mxu0 %v716
        %780 = vmatpush1.msra.mxu0 %v715
        %781 = vmatprep.subr.mxu0 %v718
        %782 = vmatpush1.msra.mxu0 %v717
        %783 = vmatprep.subr.mxu0 %v720
        %784 = vmatpush1.msra.mxu0 %v719
        %785 = vmatprep.subr.mxu0 %v722
        %786 = vmatpush1.msra.mxu0 %v721
        %787 = vmatprep.subr.mxu0 %v724
        %788 = vmatpush1.msra.mxu0 %v723
        %789 = vmatprep.subr.mxu0 %v726
        %790 = vmatpush1.msra.mxu0 %v725
        %791 = vmatprep.subr.mxu0 %v728
        %792 = vmatpush1.msra.mxu0 %v727
        %793 = vmatprep.subr.mxu0 %v730
        %794 = vmatpush1.msra.mxu0 %v729
        %795 = vmatprep.subr.mxu0 %v732
        %796 = vmatpush1.msra.mxu0 %v731
        %797 = vmatprep.subr.mxu0 %v734
        %798 = vmatpush1.msra.mxu0 %v733
        %799 = vmatprep.subr.mxu0 %v736
        %800 = vmatpush1.msra.mxu0 %v735
        %801 = vmatprep.subr.mxu0 %v738
        %802 = vmatpush1.msra.mxu0 %v737
        %803 = vmatprep.subr.mxu0 %v740
        %804 = vmatpush1.msra.mxu0 %v739
        %805 = vmatprep.subr.mxu0 %v742
        %806 = vmatpush1.msra.mxu0 %v741
        %807 = vmatprep.subr.mxu0 %v744
        %808 = vmatpush1.msra.mxu0 %v743
        %809 = vmatprep.subr.mxu0 %v746
        %810 = vmatpush1.msra.mxu0 %v745
        %811 = vmatprep.subr.mxu0 %v748
        %812 = vmatpush1.msra.mxu0 %v747
        %813 = vmatprep.subr.mxu0 %v750
        %814 = vmatpush1.msra.mxu0 %v749
        %815 = vmatprep.subr.mxu0 %v752
        %816 = vmatpush1.msra.mxu0 %v751
        %817 = vmatprep.subr.mxu0 %v754
        %818 = vmatpush1.msra.mxu0 %v753
        %819 = vmatprep.subr.mxu0 %v756
        %820 = vmatpush1.msra.mxu0 %v755
        %821 = vmatprep.subr.mxu0 %v758
        %822 = vmatpush1.msra.mxu0 %v757
        %823 = vmatprep.subr.mxu0 %v760
        %824 = vmatpush1.msra.mxu0 %v759
        %825 = vmatprep.mubr.f32.mxu0 %v555
        %826 = vmatmul.mubr.f32.gmra.mrb[0].mxu0 %v554
        %v827 = vpop.f32.mrb[0].mxu0
        %v828 = vadd.f32 0.0, %v827
        %v829 = vpop.f32.mrb[0].mxu0
        %v830 = vadd.f32 0.0, %v829
        %831 = vdwg.mxu0
        %v832 = vmul.f32 %v556, %v693
        %v833 = vmul.f32 %v557, %v695
        %v834 = vmul.f32 %v556, %v828
        %v835 = vmul.f32 %v557, %v830
        %v836 = vld [vmem:[#allocation6] sm:$0xff]
        %v837 = vld [vmem:[#allocation6 + $0x8] sm:$0xff]
        %v838 = vld [vmem:[#allocation6 + $0x10] sm:$0xff]
        %v839 = vld [vmem:[#allocation6 + $0x18] sm:$0xff]
        %v840 = vld [vmem:[#allocation6 + $0x20] sm:$0xff]
        %v841 = vld [vmem:[#allocation6 + $0x28] sm:$0xff]
        %v842 = vld [vmem:[#allocation6 + $0x30] sm:$0xff]
        %v843 = vld [vmem:[#allocation6 + $0x38] sm:$0xff]
        %v844 = vld [vmem:[#allocation6 + $0x40] sm:$0xff]
        %v845 = vld [vmem:[#allocation6 + $0x48] sm:$0xff]
        %v846 = vld [vmem:[#allocation6 + $0x50] sm:$0xff]
        %v847 = vld [vmem:[#allocation6 + $0x58] sm:$0xff]
        %v848 = vld [vmem:[#allocation6 + $0x60] sm:$0xff]
        %v849 = vld [vmem:[#allocation6 + $0x68] sm:$0xff]
        %v850 = vld [vmem:[#allocation6 + $0x70] sm:$0xff]
        %v851 = vld [vmem:[#allocation6 + $0x78] sm:$0xff]
        %v852 = vld [vmem:[#allocation6 + $0x80] sm:$0xff]
        %v853 = vld [vmem:[#allocation6 + $0x88] sm:$0xff]
        %v854 = vld [vmem:[#allocation6 + $0x90] sm:$0xff]
        %v855 = vld [vmem:[#allocation6 + $0x98] sm:$0xff]
        %v856 = vld [vmem:[#allocation6 + $0xa0] sm:$0xff]
        %v857 = vld [vmem:[#allocation6 + $0xa8] sm:$0xff]
        %v858 = vld [vmem:[#allocation6 + $0xb0] sm:$0xff]
        %v859 = vld [vmem:[#allocation6 + $0xb8] sm:$0xff]
        %v860 = vld [vmem:[#allocation6 + $0xc0] sm:$0xff]
        %v861 = vld [vmem:[#allocation6 + $0xc8] sm:$0xff]
        %v862 = vld [vmem:[#allocation6 + $0xd0] sm:$0xff]
        %v863 = vld [vmem:[#allocation6 + $0xd8] sm:$0xff]
        %v864 = vld [vmem:[#allocation6 + $0xe0] sm:$0xff]
        %v865 = vld [vmem:[#allocation6 + $0xe8] sm:$0xff]
        %v866 = vld [vmem:[#allocation6 + $0xf0] sm:$0xff]
        %v867 = vld [vmem:[#allocation6 + $0xf8] sm:$0xff]
        %v868 = vld [vmem:[#allocation6 + $0x100] sm:$0xff]
        %v869 = vld [vmem:[#allocation6 + $0x108] sm:$0xff]
        %v870 = vld [vmem:[#allocation6 + $0x110] sm:$0xff]
        %v871 = vld [vmem:[#allocation6 + $0x118] sm:$0xff]
        %v872 = vld [vmem:[#allocation6 + $0x120] sm:$0xff]
        %v873 = vld [vmem:[#allocation6 + $0x128] sm:$0xff]
        %v874 = vld [vmem:[#allocation6 + $0x130] sm:$0xff]
        %v875 = vld [vmem:[#allocation6 + $0x138] sm:$0xff]
        %v876 = vld [vmem:[#allocation6 + $0x140] sm:$0xff]
        %v877 = vld [vmem:[#allocation6 + $0x148] sm:$0xff]
        %v878 = vld [vmem:[#allocation6 + $0x150] sm:$0xff]
        %v879 = vld [vmem:[#allocation6 + $0x158] sm:$0xff]
        %v880 = vld [vmem:[#allocation6 + $0x160] sm:$0xff]
        %v881 = vld [vmem:[#allocation6 + $0x168] sm:$0xff]
        %v882 = vld [vmem:[#allocation6 + $0x170] sm:$0xff]
        %v883 = vld [vmem:[#allocation6 + $0x178] sm:$0xff]
        %v884 = vld [vmem:[#allocation6 + $0x180] sm:$0xff]
        %v885 = vld [vmem:[#allocation6 + $0x188] sm:$0xff]
        %v886 = vld [vmem:[#allocation6 + $0x190] sm:$0xff]
        %v887 = vld [vmem:[#allocation6 + $0x198] sm:$0xff]
        %v888 = vld [vmem:[#allocation6 + $0x1a0] sm:$0xff]
        %v889 = vld [vmem:[#allocation6 + $0x1a8] sm:$0xff]
        %v890 = vld [vmem:[#allocation6 + $0x1b0] sm:$0xff]
        %v891 = vld [vmem:[#allocation6 + $0x1b8] sm:$0xff]
        %v892 = vld [vmem:[#allocation6 + $0x1c0] sm:$0xff]
        %v893 = vld [vmem:[#allocation6 + $0x1c8] sm:$0xff]
        %v894 = vld [vmem:[#allocation6 + $0x1d0] sm:$0xff]
        %v895 = vld [vmem:[#allocation6 + $0x1d8] sm:$0xff]
        %v896 = vld [vmem:[#allocation6 + $0x1e0] sm:$0xff]
        %v897 = vld [vmem:[#allocation6 + $0x1e8] sm:$0xff]
        %v898 = vld [vmem:[#allocation6 + $0x1f0] sm:$0xff]
        %v899 = vld [vmem:[#allocation6 + $0x1f8] sm:$0xff]
        %900 = vmatprep.subr.mxu0 %v837
        %901 = vmatpush1.msra.mxu0 %v836
        %902 = vmatprep.subr.mxu0 %v839
        %903 = vmatpush1.msra.mxu0 %v838
        %904 = vmatprep.subr.mxu0 %v841
        %905 = vmatpush1.msra.mxu0 %v840
        %906 = vmatprep.subr.mxu0 %v843
        %907 = vmatpush1.msra.mxu0 %v842
        %908 = vmatprep.subr.mxu0 %v845
        %909 = vmatpush1.msra.mxu0 %v844
        %910 = vmatprep.subr.mxu0 %v847
        %911 = vmatpush1.msra.mxu0 %v846
        %912 = vmatprep.subr.mxu0 %v849
        %913 = vmatpush1.msra.mxu0 %v848
        %914 = vmatprep.subr.mxu0 %v851
        %915 = vmatpush1.msra.mxu0 %v850
        %916 = vmatprep.subr.mxu0 %v853
        %917 = vmatpush1.msra.mxu0 %v852
        %918 = vmatprep.subr.mxu0 %v855
        %919 = vmatpush1.msra.mxu0 %v854
        %920 = vmatprep.subr.mxu0 %v857
        %921 = vmatpush1.msra.mxu0 %v856
        %922 = vmatprep.subr.mxu0 %v859
        %923 = vmatpush1.msra.mxu0 %v858
        %924 = vmatprep.subr.mxu0 %v861
        %925 = vmatpush1.msra.mxu0 %v860
        %926 = vmatprep.subr.mxu0 %v863
        %927 = vmatpush1.msra.mxu0 %v862
        %928 = vmatprep.subr.mxu0 %v865
        %929 = vmatpush1.msra.mxu0 %v864
        %930 = vmatprep.subr.mxu0 %v867
        %931 = vmatpush1.msra.mxu0 %v866
        %932 = vmatprep.subr.mxu0 %v869
        %933 = vmatpush1.msra.mxu0 %v868
        %934 = vmatprep.subr.mxu0 %v871
        %935 = vmatpush1.msra.mxu0 %v870
        %936 = vmatprep.subr.mxu0 %v873
        %937 = vmatpush1.msra.mxu0 %v872
        %938 = vmatprep.subr.mxu0 %v875
        %939 = vmatpush1.msra.mxu0 %v874
        %940 = vmatprep.subr.mxu0 %v877
        %941 = vmatpush1.msra.mxu0 %v876
        %942 = vmatprep.subr.mxu0 %v879
        %943 = vmatpush1.msra.mxu0 %v878
        %944 = vmatprep.subr.mxu0 %v881
        %945 = vmatpush1.msra.mxu0 %v880
        %946 = vmatprep.subr.mxu0 %v883
        %947 = vmatpush1.msra.mxu0 %v882
        %948 = vmatprep.subr.mxu0 %v885
        %949 = vmatpush1.msra.mxu0 %v884
        %950 = vmatprep.subr.mxu0 %v887
        %951 = vmatpush1.msra.mxu0 %v886
        %952 = vmatprep.subr.mxu0 %v889
        %953 = vmatpush1.msra.mxu0 %v888
        %954 = vmatprep.subr.mxu0 %v891
        %955 = vmatpush1.msra.mxu0 %v890
        %956 = vmatprep.subr.mxu0 %v893
        %957 = vmatpush1.msra.mxu0 %v892
        %958 = vmatprep.subr.mxu0 %v895
        %959 = vmatpush1.msra.mxu0 %v894
        %960 = vmatprep.subr.mxu0 %v897
        %961 = vmatpush1.msra.mxu0 %v896
        %962 = vmatprep.subr.mxu0 %v899
        %963 = vmatpush1.msra.mxu0 %v898
        %964 = vmatprep.mubr.f32.mxu0 %v833
        %965 = vmatmul.mubr.f32.gmra.mrb[0].mxu0 %v832
        %v966 = vpop.f32.mrb[0].mxu0
        %v967 = vadd.f32 0.0, %v966
        %v968 = vpop.f32.mrb[0].mxu0
        %v969 = vadd.f32 0.0, %v968
        %970 = vdwg.mxu0
        %v971 = vld [vmem:[#allocation7] sm:$0xff]
        %v972 = vld [vmem:[#allocation7 + $0x8] sm:$0xff]
        %v973 = vld [vmem:[#allocation7 + $0x10] sm:$0xff]
        %v974 = vld [vmem:[#allocation7 + $0x18] sm:$0xff]
        %v975 = vld [vmem:[#allocation7 + $0x20] sm:$0xff]
        %v976 = vld [vmem:[#allocation7 + $0x28] sm:$0xff]
        %v977 = vld [vmem:[#allocation7 + $0x30] sm:$0xff]
        %v978 = vld [vmem:[#allocation7 + $0x38] sm:$0xff]
        %v979 = vld [vmem:[#allocation7 + $0x40] sm:$0xff]
        %v980 = vld [vmem:[#allocation7 + $0x48] sm:$0xff]
        %v981 = vld [vmem:[#allocation7 + $0x50] sm:$0xff]
        %v982 = vld [vmem:[#allocation7 + $0x58] sm:$0xff]
        %v983 = vld [vmem:[#allocation7 + $0x60] sm:$0xff]
        %v984 = vld [vmem:[#allocation7 + $0x68] sm:$0xff]
        %v985 = vld [vmem:[#allocation7 + $0x70] sm:$0xff]
        %v986 = vld [vmem:[#allocation7 + $0x78] sm:$0xff]
        %v987 = vld [vmem:[#allocation7 + $0x80] sm:$0xff]
        %v988 = vld [vmem:[#allocation7 + $0x88] sm:$0xff]
        %v989 = vld [vmem:[#allocation7 + $0x90] sm:$0xff]
        %v990 = vld [vmem:[#allocation7 + $0x98] sm:$0xff]
        %v991 = vld [vmem:[#allocation7 + $0xa0] sm:$0xff]
        %v992 = vld [vmem:[#allocation7 + $0xa8] sm:$0xff]
        %v993 = vld [vmem:[#allocation7 + $0xb0] sm:$0xff]
        %v994 = vld [vmem:[#allocation7 + $0xb8] sm:$0xff]
        %v995 = vld [vmem:[#allocation7 + $0xc0] sm:$0xff]
        %v996 = vld [vmem:[#allocation7 + $0xc8] sm:$0xff]
        %v997 = vld [vmem:[#allocation7 + $0xd0] sm:$0xff]
        %v998 = vld [vmem:[#allocation7 + $0xd8] sm:$0xff]
        %v999 = vld [vmem:[#allocation7 + $0xe0] sm:$0xff]
        %v1000 = vld [vmem:[#allocation7 + $0xe8] sm:$0xff]
        %v1001 = vld [vmem:[#allocation7 + $0xf0] sm:$0xff]
        %v1002 = vld [vmem:[#allocation7 + $0xf8] sm:$0xff]
        %v1003 = vld [vmem:[#allocation7 + $0x100] sm:$0xff]
        %v1004 = vld [vmem:[#allocation7 + $0x108] sm:$0xff]
        %v1005 = vld [vmem:[#allocation7 + $0x110] sm:$0xff]
        %v1006 = vld [vmem:[#allocation7 + $0x118] sm:$0xff]
        %v1007 = vld [vmem:[#allocation7 + $0x120] sm:$0xff]
        %v1008 = vld [vmem:[#allocation7 + $0x128] sm:$0xff]
        %v1009 = vld [vmem:[#allocation7 + $0x130] sm:$0xff]
        %v1010 = vld [vmem:[#allocation7 + $0x138] sm:$0xff]
        %v1011 = vld [vmem:[#allocation7 + $0x140] sm:$0xff]
        %v1012 = vld [vmem:[#allocation7 + $0x148] sm:$0xff]
        %v1013 = vld [vmem:[#allocation7 + $0x150] sm:$0xff]
        %v1014 = vld [vmem:[#allocation7 + $0x158] sm:$0xff]
        %v1015 = vld [vmem:[#allocation7 + $0x160] sm:$0xff]
        %v1016 = vld [vmem:[#allocation7 + $0x168] sm:$0xff]
        %v1017 = vld [vmem:[#allocation7 + $0x170] sm:$0xff]
        %v1018 = vld [vmem:[#allocation7 + $0x178] sm:$0xff]
        %v1019 = vld [vmem:[#allocation7 + $0x180] sm:$0xff]
        %v1020 = vld [vmem:[#allocation7 + $0x188] sm:$0xff]
        %v1021 = vld [vmem:[#allocation7 + $0x190] sm:$0xff]
        %v1022 = vld [vmem:[#allocation7 + $0x198] sm:$0xff]
        %v1023 = vld [vmem:[#allocation7 + $0x1a0] sm:$0xff]
        %v1024 = vld [vmem:[#allocation7 + $0x1a8] sm:$0xff]
        %v1025 = vld [vmem:[#allocation7 + $0x1b0] sm:$0xff]
        %v1026 = vld [vmem:[#allocation7 + $0x1b8] sm:$0xff]
        %v1027 = vld [vmem:[#allocation7 + $0x1c0] sm:$0xff]
        %v1028 = vld [vmem:[#allocation7 + $0x1c8] sm:$0xff]
        %v1029 = vld [vmem:[#allocation7 + $0x1d0] sm:$0xff]
        %v1030 = vld [vmem:[#allocation7 + $0x1d8] sm:$0xff]
        %v1031 = vld [vmem:[#allocation7 + $0x1e0] sm:$0xff]
        %v1032 = vld [vmem:[#allocation7 + $0x1e8] sm:$0xff]
        %v1033 = vld [vmem:[#allocation7 + $0x1f0] sm:$0xff]
        %v1034 = vld [vmem:[#allocation7 + $0x1f8] sm:$0xff]
        %1035 = vmatprep.subr.mxu0 %v972
        %1036 = vmatpush1.msra.mxu0 %v971
        %1037 = vmatprep.subr.mxu0 %v974
        %1038 = vmatpush1.msra.mxu0 %v973
        %1039 = vmatprep.subr.mxu0 %v976
        %1040 = vmatpush1.msra.mxu0 %v975
        %1041 = vmatprep.subr.mxu0 %v978
        %1042 = vmatpush1.msra.mxu0 %v977
        %1043 = vmatprep.subr.mxu0 %v980
        %1044 = vmatpush1.msra.mxu0 %v979
        %1045 = vmatprep.subr.mxu0 %v982
        %1046 = vmatpush1.msra.mxu0 %v981
        %1047 = vmatprep.subr.mxu0 %v984
        %1048 = vmatpush1.msra.mxu0 %v983
        %1049 = vmatprep.subr.mxu0 %v986
        %1050 = vmatpush1.msra.mxu0 %v985
        %1051 = vmatprep.subr.mxu0 %v988
        %1052 = vmatpush1.msra.mxu0 %v987
        %1053 = vmatprep.subr.mxu0 %v990
        %1054 = vmatpush1.msra.mxu0 %v989
        %1055 = vmatprep.subr.mxu0 %v992
        %1056 = vmatpush1.msra.mxu0 %v991
        %1057 = vmatprep.subr.mxu0 %v994
        %1058 = vmatpush1.msra.mxu0 %v993
        %1059 = vmatprep.subr.mxu0 %v996
        %1060 = vmatpush1.msra.mxu0 %v995
        %1061 = vmatprep.subr.mxu0 %v998
        %1062 = vmatpush1.msra.mxu0 %v997
        %1063 = vmatprep.subr.mxu0 %v1000
        %1064 = vmatpush1.msra.mxu0 %v999
        %1065 = vmatprep.subr.mxu0 %v1002
        %1066 = vmatpush1.msra.mxu0 %v1001
        %1067 = vmatprep.subr.mxu0 %v1004
        %1068 = vmatpush1.msra.mxu0 %v1003
        %1069 = vmatprep.subr.mxu0 %v1006
        %1070 = vmatpush1.msra.mxu0 %v1005
        %1071 = vmatprep.subr.mxu0 %v1008
        %1072 = vmatpush1.msra.mxu0 %v1007
        %1073 = vmatprep.subr.mxu0 %v1010
        %1074 = vmatpush1.msra.mxu0 %v1009
        %1075 = vmatprep.subr.mxu0 %v1012
        %1076 = vmatpush1.msra.mxu0 %v1011
        %1077 = vmatprep.subr.mxu0 %v1014
        %1078 = vmatpush1.msra.mxu0 %v1013
        %1079 = vmatprep.subr.mxu0 %v1016
        %1080 = vmatpush1.msra.mxu0 %v1015
        %1081 = vmatprep.subr.mxu0 %v1018
        %1082 = vmatpush1.msra.mxu0 %v1017
        %1083 = vmatprep.subr.mxu0 %v1020
        %1084 = vmatpush1.msra.mxu0 %v1019
        %1085 = vmatprep.subr.mxu0 %v1022
        %1086 = vmatpush1.msra.mxu0 %v1021
        %1087 = vmatprep.subr.mxu0 %v1024
        %1088 = vmatpush1.msra.mxu0 %v1023
        %1089 = vmatprep.subr.mxu0 %v1026
        %1090 = vmatpush1.msra.mxu0 %v1025
        %1091 = vmatprep.subr.mxu0 %v1028
        %1092 = vmatpush1.msra.mxu0 %v1027
        %1093 = vmatprep.subr.mxu0 %v1030
        %1094 = vmatpush1.msra.mxu0 %v1029
        %1095 = vmatprep.subr.mxu0 %v1032
        %1096 = vmatpush1.msra.mxu0 %v1031
        %1097 = vmatprep.subr.mxu0 %v1034
        %1098 = vmatpush1.msra.mxu0 %v1033
        %1099 = vmatprep.mubr.f32.mxu0 %v835
        %1100 = vmatmul.mubr.f32.gmra.mrb[0].mxu0 %v834
        %v1101 = vpop.f32.mrb[0].mxu0
        %v1102 = vadd.f32 0.0, %v1101
        %v1103 = vpop.f32.mrb[0].mxu0
        %v1104 = vadd.f32 0.0, %v1103
        %1105 = vdwg.mxu0
        %v1106 = vsub.f32 %v967, %v1102
        %v1107 = vsub.f32 %v969, %v1104
        %1109 = vrot.lane.b32.xlu0 %v1107, 17
        %v1110 = vpop.permute.xlu0 %1109
        %1113 = vrot.lane.b32.xlu0 %v1106, 17
        %v1114 = vpop.permute.xlu0 %1113
        %vm1115 = vcmask 138240
        %v1116 = vsel %vm1115, %v1114, %v1110
        %v1119 = vsel %vm1115, %v1110, %v1114
        %v1120 = vlaneseq
        %v1121 = vshrl.u32 %v1120, 7
        %v1122 = vsub.s32 0, %v1121
        %v1123 = vrot.slane %v558, %v1122
        %v1124 = vlaneseq
        %v1125 = vshrl.u32 %v1124, 7
        %v1126 = vsub.s32 0, %v1125
        %v1127 = vrot.slane %v559, %v1126
        %v1128 = vmul.f32 %v1119, %v1123
        %v1129 = vmul.f32 %v1116, %v1127
        %1130 = vrot.lane.b32.xlu0 %v1107, 16
        %v1131 = vpop.permute.xlu0 %1130
        %1133 = vrot.lane.b32.xlu0 %v1106, 16
        %v1134 = vpop.permute.xlu0 %1133
        %vm1135 = vcmask 130048
        %v1136 = vsel %vm1135, %v1134, %v1131
        %v1139 = vsel %vm1135, %v1131, %v1134
        %v1140 = vlaneseq
        %v1141 = vshrl.u32 %v1140, 7
        %v1142 = vsub.s32 1, %v1141
        %v1143 = vrot.slane %v558, %v1142
        %v1144 = vlaneseq
        %v1145 = vshrl.u32 %v1144, 7
        %v1146 = vsub.s32 1, %v1145
        %v1147 = vrot.slane %v559, %v1146
        %v1148 = vmul.f32 %v1139, %v1143
        %v1149 = vmul.f32 %v1136, %v1147
        %1150 = vrot.lane.b32.xlu0 %v1107, 15
        %v1151 = vpop.permute.xlu0 %1150
        %1153 = vrot.lane.b32.xlu0 %v1106, 15
        %v1154 = vpop.permute.xlu0 %1153
        %vm1155 = vcmask 121856
        %v1156 = vsel %vm1155, %v1154, %v1151
        %v1159 = vsel %vm1155, %v1151, %v1154
        %v1160 = vlaneseq
        %v1161 = vshrl.u32 %v1160, 7
        %v1162 = vsub.s32 2, %v1161
        %v1163 = vrot.slane %v558, %v1162
        %v1164 = vlaneseq
        %v1165 = vshrl.u32 %v1164, 7
        %v1166 = vsub.s32 2, %v1165
        %v1167 = vrot.slane %v559, %v1166
        %v1168 = vmul.f32 %v1159, %v1163
        %v1169 = vmul.f32 %v1156, %v1167
        %1170 = vrot.lane.b32.xlu0 %v1107, 1
        %v1171 = vpop.permute.xlu0 %1170
        %1173 = vrot.lane.b32.xlu0 %v1106, 1
        %v1174 = vpop.permute.xlu0 %1173
        %vm1175 = vcmask 7168
        %v1176 = vsel %vm1175, %v1174, %v1171
        %v1179 = vsel %vm1175, %v1171, %v1174
        %v1180 = vlaneseq
        %v1181 = vshrl.u32 %v1180, 7
        %v1182 = vsub.s32 3, %v1181
        %v1183 = vrot.slane %v558, %v1182
        %v1184 = vlaneseq
        %v1185 = vshrl.u32 %v1184, 7
        %v1186 = vsub.s32 3, %v1185
        %v1187 = vrot.slane %v559, %v1186
        %v1188 = vmul.f32 %v1179, %v1183
        %v1189 = vmul.f32 %v1176, %v1187
        %v1190 = vlaneseq
        %v1191 = vshrl.u32 %v1190, 7
        %v1192 = vsub.s32 4, %v1191
        %v1193 = vrot.slane %v558, %v1192
        %v1194 = vlaneseq
        %v1195 = vshrl.u32 %v1194, 7
        %v1196 = vsub.s32 4, %v1195
        %v1197 = vrot.slane %v559, %v1196
        %v1198 = vmul.f32 %v1106, %v1193
        %v1199 = vmul.f32 %v1107, %v1197
        %1200 = vrot.lane.b32.xlu0 %v1106, 127
        %v1201 = vpop.permute.xlu0 %1200
        %1202 = vrot.lane.b32.xlu0 %v1107, 127
        %v1203 = vpop.permute.xlu0 %1202
        %vm1204 = vcmask 1039360
        %v1205 = vsel %vm1204, %v1201, %v1203
        %v1209 = vsel %vm1204, %v1203, %v1201
        %v1210 = vlaneseq
        %v1211 = vshrl.u32 %v1210, 7
        %v1212 = vsub.s32 5, %v1211
        %v1213 = vrot.slane %v558, %v1212
        %v1214 = vlaneseq
        %v1215 = vshrl.u32 %v1214, 7
        %v1216 = vsub.s32 5, %v1215
        %v1217 = vrot.slane %v559, %v1216
        %v1218 = vmul.f32 %v1205, %v1213
        %v1219 = vmul.f32 %v1209, %v1217
        %1220 = vrot.lane.b32.xlu0 %v1106, 113
        %v1221 = vpop.permute.xlu0 %1220
        %1222 = vrot.lane.b32.xlu0 %v1107, 113
        %v1223 = vpop.permute.xlu0 %1222
        %vm1224 = vcmask 924672
        %v1225 = vsel %vm1224, %v1221, %v1223
        %v1229 = vsel %vm1224, %v1223, %v1221
        %v1230 = vlaneseq
        %v1231 = vshrl.u32 %v1230, 7
        %v1232 = vsub.s32 6, %v1231
        %v1233 = vrot.slane %v558, %v1232
        %v1234 = vlaneseq
        %v1235 = vshrl.u32 %v1234, 7
        %v1236 = vsub.s32 6, %v1235
        %v1237 = vrot.slane %v559, %v1236
        %v1238 = vmul.f32 %v1225, %v1233
        %v1239 = vmul.f32 %v1229, %v1237
        %1240 = vrot.lane.b32.xlu0 %v1106, 112
        %v1241 = vpop.permute.xlu0 %1240
        %1242 = vrot.lane.b32.xlu0 %v1107, 112
        %v1243 = vpop.permute.xlu0 %1242
        %vm1244 = vcmask 916480
        %v1245 = vsel %vm1244, %v1241, %v1243
        %v1249 = vsel %vm1244, %v1243, %v1241
        %v1250 = vlaneseq
        %v1251 = vshrl.u32 %v1250, 7
        %v1252 = vsub.s32 7, %v1251
        %v1253 = vrot.slane %v558, %v1252
        %v1254 = vlaneseq
        %v1255 = vshrl.u32 %v1254, 7
        %v1256 = vsub.s32 7, %v1255
        %v1257 = vrot.slane %v559, %v1256
        %v1258 = vmul.f32 %v1245, %v1253
        %v1259 = vmul.f32 %v1249, %v1257
        %1260 = vrot.lane.b32.xlu0 %v1106, 111
        %v1261 = vpop.permute.xlu0 %1260
        %1262 = vrot.lane.b32.xlu0 %v1107, 111
        %v1263 = vpop.permute.xlu0 %1262
        %vm1264 = vcmask 908288
        %v1265 = vsel %vm1264, %v1261, %v1263
        %v1269 = vsel %vm1264, %v1263, %v1261
        %v1270 = vlaneseq
        %v1271 = vshrl.u32 %v1270, 7
        %v1272 = vsub.s32 0, %v1271
        %v1273 = vrot.slane %v560, %v1272
        %v1274 = vlaneseq
        %v1275 = vshrl.u32 %v1274, 7
        %v1276 = vsub.s32 0, %v1275
        %v1277 = vrot.slane %v561, %v1276
        %v1278 = vmul.f32 %v1265, %v1273
        %v1279 = vmul.f32 %v1269, %v1277
        %v1280 = vld [vmem:[%s7] sm:$0xff]
        %v1281 = vld [vmem:[%s8] sm:$0xff]
        %1283 = vset.pattern.permute.xlu0 0
        %1284 = vperm.xlu0 %1283, %v1281
        %v1285 = vpop.permute.xlu0 %1284
        %vm1287 = vcmask 588800
        %v1289 = vsel %vm1287, %v1280, 0
        %1291 = vmatprep.subr.mxu0 %v1129
        %1292 = vmatpush1.msra.mxu0 %v1128
        %1293 = vmatprep.subr.mxu0 %v1149
        %1294 = vmatpush1.msra.mxu0 %v1148
        %1295 = vmatprep.subr.mxu0 %v1169
        %1296 = vmatpush1.msra.mxu0 %v1168
        %1297 = vmatprep.subr.mxu0 %v1189
        %1298 = vmatpush1.msra.mxu0 %v1188
        %1299 = vmatprep.subr.mxu0 %v1199
        %1300 = vmatpush1.msra.mxu0 %v1198
        %1301 = vmatprep.subr.mxu0 %v1219
        %1302 = vmatpush1.msra.mxu0 %v1218
        %1303 = vmatprep.subr.mxu0 %v1239
        %1304 = vmatpush1.msra.mxu0 %v1238
        %1305 = vmatprep.subr.mxu0 %v1259
        %1306 = vmatpush1.msra.mxu0 %v1258
        %1307 = vmatprep.subr.mxu0 %v1279
        %1308 = vmatpush1.msra.mxu0 %v1278
        %1309 = vmatprep.subr.mxu0 0.0
        %1310 = vmatpush1.msra.mxu0 0.0
        %1311 = vmatprep.subr.mxu0 0.0
        %1312 = vmatpush1.msra.mxu0 0.0
        %1313 = vmatprep.subr.mxu0 0.0
        %1314 = vmatpush1.msra.mxu0 0.0
        %1315 = vmatprep.subr.mxu0 0.0
        %1316 = vmatpush1.msra.mxu0 0.0
        %1317 = vmatprep.subr.mxu0 0.0
        %1318 = vmatpush1.msra.mxu0 0.0
        %1319 = vmatprep.subr.mxu0 0.0
        %1320 = vmatpush1.msra.mxu0 0.0
        %1321 = vmatprep.subr.mxu0 0.0
        %1322 = vmatpush1.msra.mxu0 0.0
        %1323 = vmatprep.subr.mxu0 0.0
        %1324 = vmatpush1.msra.mxu0 0.0
        %1325 = vmatprep.subr.mxu0 0.0
        %1326 = vmatpush1.msra.mxu0 0.0
        %1327 = vmatprep.subr.mxu0 0.0
        %1328 = vmatpush1.msra.mxu0 0.0
        %1329 = vmatprep.subr.mxu0 0.0
        %1330 = vmatpush1.msra.mxu0 0.0
        %1331 = vmatprep.subr.mxu0 0.0
        %1332 = vmatpush1.msra.mxu0 0.0
        %1333 = vmatprep.subr.mxu0 0.0
        %1334 = vmatpush1.msra.mxu0 0.0
        %1335 = vmatprep.subr.mxu0 0.0
        %1336 = vmatpush1.msra.mxu0 0.0
        %1337 = vmatprep.subr.mxu0 0.0
        %1338 = vmatpush1.msra.mxu0 0.0
        %1339 = vmatprep.subr.mxu0 0.0
        %1340 = vmatpush1.msra.mxu0 0.0
        %1341 = vmatprep.subr.mxu0 0.0
        %1342 = vmatpush1.msra.mxu0 0.0
        %1343 = vmatprep.subr.mxu0 0.0
        %1344 = vmatpush1.msra.mxu0 0.0
        %1345 = vmatprep.subr.mxu0 0.0
        %1346 = vmatpush1.msra.mxu0 0.0
        %1347 = vmatprep.subr.mxu0 0.0
        %1348 = vmatpush1.msra.mxu0 0.0
        %1349 = vmatprep.subr.mxu0 0.0
        %1350 = vmatpush1.msra.mxu0 0.0
        %1351 = vmatprep.subr.mxu0 0.0
        %1352 = vmatpush1.msra.mxu0 0.0
        %1353 = vmatprep.subr.mxu0 0.0
        %1354 = vmatpush1.msra.mxu0 0.0
        %1355 = vmatprep.mubr.f32.mxu0 0.0
        %1356 = vmatmul.mubr.f32.gmra.mrb[0].mxu0 %v1289
        %v1357 = vpop.f32.mrb[0].mxu0
        %v1358 = vadd.f32 %v1285, %v1357
        %v1359 = vpop.f32.mrb[0].mxu0
        %v1360 = vadd.f32 %v1285, %v1359
        %1361 = vdwg.mxu0
        %v1362 = vadd.f32 %v1358, %v1360
        %1363 = vadd.xlane.f32.xlu0 %v1362
        %v1364 = vpop.xlane.xlu0 %1363
        %v1365 = vmul.f32 %v1358, %v1358
        %v1366 = vmul.f32 %v1360, %v1360
        %v1367 = vadd.f32 %v1365, %v1366
        %1368 = vadd.xlane.f32.xlu0 %v1367
        %v1369 = vpop.xlane.xlu0 %1368
        %v1370 = vmul.f32 %v1364, 0.00390625
        %v1371 = vmul.f32 %v1369, 0.00390625
        %v1372 = vmul.f32 %v1370, %v1370
        %v1373 = vsub.f32 %v1371, %v1372
        %v1374 = vsub.f32 %v1358, %v1370
        %v1375 = vsub.f32 %v1360, %v1370
        %v1376 = vadd.f32 %v1373, 1e-05
        %v1377 = vrsqrt.pop %v1376
        %v1378 = vmul.f32 %v1374, %v1377
        %v1379 = vmul.f32 %v1375, %v1377
        %v1380 = vld [vmem:[%s9] sm:$0xff]
        %1382 = vset.pattern.permute.xlu0 0
        %1383 = vperm.xlu0 %1382, %v1380
        %v1384 = vpop.permute.xlu0 %1383
        %v1386 = vmul.f32 %v1378, %v1384
        %v1387 = vmul.f32 %v1379, %v1384
        %v1388 = vld [vmem:[%s10] sm:$0xff]
        %1390 = vset.pattern.permute.xlu0 0
        %1391 = vperm.xlu0 %1390, %v1388
        %v1392 = vpop.permute.xlu0 %1391
        %v1394 = vadd.f32 %v1386, %v1392
        %v1395 = vadd.f32 %v1387, %v1392
        %v1396 = vsub.f32 0.0, %v1394
        %v1397 = vsub.f32 0.0, %v1395
        %v1398 = vmul.f32 %v1396, 1.442695
        %v1399 = vpow.pop %v1398
        %v1400 = vmul.f32 %v1397, 1.442695
        %v1401 = vpow.pop %v1400
        %v1402 = vadd.f32 %v1399, 1.0
        %v1403 = vadd.f32 %v1401, 1.0
        %v1404 = vrcp.pop %v1402
        %v1405 = vmul.f32 1.0, %v1404
        %v1406 = vrcp.pop %v1403
        %v1407 = vmul.f32 1.0, %v1406
        %v1408 = vmul.f32 %v1394, %v1405
        %v1409 = vmul.f32 %v1395, %v1407
        %1411 = vrot.lane.b32.xlu0 %v1409, 17
        %v1412 = vpop.permute.xlu0 %1411
        %1415 = vrot.lane.b32.xlu0 %v1408, 17
        %v1416 = vpop.permute.xlu0 %1415
        %v1417 = vsel %vm1115, %v1416, %v1412
        %v1420 = vsel %vm1115, %v1412, %v1416
        %v1421 = vmul.f32 %v1420, %v1123
        %v1422 = vmul.f32 %v1417, %v1127
        %1423 = vrot.lane.b32.xlu0 %v1409, 16
        %v1424 = vpop.permute.xlu0 %1423
        %1426 = vrot.lane.b32.xlu0 %v1408, 16
        %v1427 = vpop.permute.xlu0 %1426
        %v1428 = vsel %vm1135, %v1427, %v1424
        %v1431 = vsel %vm1135, %v1424, %v1427
        %v1432 = vmul.f32 %v1431, %v1143
        %v1433 = vmul.f32 %v1428, %v1147
        %1434 = vrot.lane.b32.xlu0 %v1409, 15
        %v1435 = vpop.permute.xlu0 %1434
        %1437 = vrot.lane.b32.xlu0 %v1408, 15
        %v1438 = vpop.permute.xlu0 %1437
        %v1439 = vsel %vm1155, %v1438, %v1435
        %v1442 = vsel %vm1155, %v1435, %v1438
        %v1443 = vmul.f32 %v1442, %v1163
        %v1444 = vmul.f32 %v1439, %v1167
        %1445 = vrot.lane.b32.xlu0 %v1409, 1
        %v1446 = vpop.permute.xlu0 %1445
        %1448 = vrot.lane.b32.xlu0 %v1408, 1
        %v1449 = vpop.permute.xlu0 %1448
        %v1450 = vsel %vm1175, %v1449, %v1446
        %v1453 = vsel %vm1175, %v1446, %v1449
        %v1454 = vmul.f32 %v1453, %v1183
        %v1455 = vmul.f32 %v1450, %v1187
        %v1456 = vmul.f32 %v1408, %v1193
        %v1457 = vmul.f32 %v1409, %v1197
        %1458 = vrot.lane.b32.xlu0 %v1408, 127
        %v1459 = vpop.permute.xlu0 %1458
        %1460 = vrot.lane.b32.xlu0 %v1409, 127
        %v1461 = vpop.permute.xlu0 %1460
        %v1462 = vsel %vm1204, %v1459, %v1461
        %v1466 = vsel %vm1204, %v1461, %v1459
        %v1467 = vmul.f32 %v1462, %v1213
        %v1468 = vmul.f32 %v1466, %v1217
        %1469 = vrot.lane.b32.xlu0 %v1408, 113
        %v1470 = vpop.permute.xlu0 %1469
        %1471 = vrot.lane.b32.xlu0 %v1409, 113
        %v1472 = vpop.permute.xlu0 %1471
        %v1473 = vsel %vm1224, %v1470, %v1472
        %v1477 = vsel %vm1224, %v1472, %v1470
        %v1478 = vmul.f32 %v1473, %v1233
        %v1479 = vmul.f32 %v1477, %v1237
        %1480 = vrot.lane.b32.xlu0 %v1408, 112
        %v1481 = vpop.permute.xlu0 %1480
        %1482 = vrot.lane.b32.xlu0 %v1409, 112
        %v1483 = vpop.permute.xlu0 %1482
        %v1484 = vsel %vm1244, %v1481, %v1483
        %v1488 = vsel %vm1244, %v1483, %v1481
        %v1489 = vmul.f32 %v1484, %v1253
        %v1490 = vmul.f32 %v1488, %v1257
        %1491 = vrot.lane.b32.xlu0 %v1408, 111
        %v1492 = vpop.permute.xlu0 %1491
        %1493 = vrot.lane.b32.xlu0 %v1409, 111
        %v1494 = vpop.permute.xlu0 %1493
        %v1495 = vsel %vm1264, %v1492, %v1494
        %v1499 = vsel %vm1264, %v1494, %v1492
        %v1500 = vmul.f32 %v1495, %v1273
        %v1501 = vmul.f32 %v1499, %v1277
        %v1502 = vld [vmem:[%s11] sm:$0xff]
        %v1503 = vld [vmem:[%s12] sm:$0xff]
        %1505 = vset.pattern.permute.xlu0 0
        %1506 = vperm.xlu0 %1505, %v1503
        %v1507 = vpop.permute.xlu0 %1506
        %v1510 = vsel %vm1287, %v1502, 0
        %1512 = vmatprep.subr.mxu0 %v1422
        %1513 = vmatpush1.msra.mxu0 %v1421
        %1514 = vmatprep.subr.mxu0 %v1433
        %1515 = vmatpush1.msra.mxu0 %v1432
        %1516 = vmatprep.subr.mxu0 %v1444
        %1517 = vmatpush1.msra.mxu0 %v1443
        %1518 = vmatprep.subr.mxu0 %v1455
        %1519 = vmatpush1.msra.mxu0 %v1454
        %1520 = vmatprep.subr.mxu0 %v1457
        %1521 = vmatpush1.msra.mxu0 %v1456
        %1522 = vmatprep.subr.mxu0 %v1468
        %1523 = vmatpush1.msra.mxu0 %v1467
        %1524 = vmatprep.subr.mxu0 %v1479
        %1525 = vmatpush1.msra.mxu0 %v1478
        %1526 = vmatprep.subr.mxu0 %v1490
        %1527 = vmatpush1.msra.mxu0 %v1489
        %1528 = vmatprep.subr.mxu0 %v1501
        %1529 = vmatpush1.msra.mxu0 %v1500
        %1530 = vmatprep.subr.mxu0 0.0
        %1531 = vmatpush1.msra.mxu0 0.0
        %1532 = vmatprep.subr.mxu0 0.0
        %1533 = vmatpush1.msra.mxu0 0.0
        %1534 = vmatprep.subr.mxu0 0.0
        %1535 = vmatpush1.msra.mxu0 0.0
        %1536 = vmatprep.subr.mxu0 0.0
        %1537 = vmatpush1.msra.mxu0 0.0
        %1538 = vmatprep.subr.mxu0 0.0
        %1539 = vmatpush1.msra.mxu0 0.0
        %1540 = vmatprep.subr.mxu0 0.0
        %1541 = vmatpush1.msra.mxu0 0.0
        %1542 = vmatprep.subr.mxu0 0.0
        %1543 = vmatpush1.msra.mxu0 0.0
        %1544 = vmatprep.subr.mxu0 0.0
        %1545 = vmatpush1.msra.mxu0 0.0
        %1546 = vmatprep.subr.mxu0 0.0
        %1547 = vmatpush1.msra.mxu0 0.0
        %1548 = vmatprep.subr.mxu0 0.0
        %1549 = vmatpush1.msra.mxu0 0.0
        %1550 = vmatprep.subr.mxu0 0.0
        %1551 = vmatpush1.msra.mxu0 0.0
        %1552 = vmatprep.subr.mxu0 0.0
        %1553 = vmatpush1.msra.mxu0 0.0
        %1554 = vmatprep.subr.mxu0 0.0
        %1555 = vmatpush1.msra.mxu0 0.0
        %1556 = vmatprep.subr.mxu0 0.0
        %1557 = vmatpush1.msra.mxu0 0.0
        %1558 = vmatprep.subr.mxu0 0.0
        %1559 = vmatpush1.msra.mxu0 0.0
        %1560 = vmatprep.subr.mxu0 0.0
        %1561 = vmatpush1.msra.mxu0 0.0
        %1562 = vmatprep.subr.mxu0 0.0
        %1563 = vmatpush1.msra.mxu0 0.0
        %1564 = vmatprep.subr.mxu0 0.0
        %1565 = vmatpush1.msra.mxu0 0.0
        %1566 = vmatprep.subr.mxu0 0.0
        %1567 = vmatpush1.msra.mxu0 0.0
        %1568 = vmatprep.subr.mxu0 0.0
        %1569 = vmatpush1.msra.mxu0 0.0
        %1570 = vmatprep.subr.mxu0 0.0
        %1571 = vmatpush1.msra.mxu0 0.0
        %1572 = vmatprep.subr.mxu0 0.0
        %1573 = vmatpush1.msra.mxu0 0.0
        %1574 = vmatprep.subr.mxu0 0.0
        %1575 = vmatpush1.msra.mxu0 0.0
        %1576 = vmatprep.mubr.f32.mxu0 0.0
        %1577 = vmatmul.mubr.f32.gmra.mrb[0].mxu0 %v1510
        %v1578 = vpop.f32.mrb[0].mxu0
        %v1579 = vadd.f32 %v1507, %v1578
        %v1580 = vpop.f32.mrb[0].mxu0
        %v1581 = vadd.f32 %v1507, %v1580
        %1582 = vdwg.mxu0
        %v1583 = vadd.f32 %v1579, %v1581
        %1584 = vadd.xlane.f32.xlu0 %v1583
        %v1585 = vpop.xlane.xlu0 %1584
        %v1586 = vmul.f32 %v1579, %v1579
        %v1587 = vmul.f32 %v1581, %v1581
        %v1588 = vadd.f32 %v1586, %v1587
        %1589 = vadd.xlane.f32.xlu0 %v1588
        %v1590 = vpop.xlane.xlu0 %1589
        %v1591 = vmul.f32 %v1585, 0.00390625
        %v1592 = vmul.f32 %v1590, 0.00390625
        %v1593 = vmul.f32 %v1591, %v1591
        %v1594 = vsub.f32 %v1592, %v1593
        %v1595 = vsub.f32 %v1579, %v1591
        %v1596 = vsub.f32 %v1581, %v1591
        %v1597 = vadd.f32 %v1594, 1e-05
        %v1598 = vrsqrt.pop %v1597
        %v1599 = vmul.f32 %v1595, %v1598
        %v1600 = vmul.f32 %v1596, %v1598
        %v1601 = vld [vmem:[%s13] sm:$0xff]
        %1603 = vset.pattern.permute.xlu0 0
        %1604 = vperm.xlu0 %1603, %v1601
        %v1605 = vpop.permute.xlu0 %1604
        %v1607 = vmul.f32 %v1599, %v1605
        %v1608 = vmul.f32 %v1600, %v1605
        %v1609 = vld [vmem:[%s14] sm:$0xff]
        %1611 = vset.pattern.permute.xlu0 0
        %1612 = vperm.xlu0 %1611, %v1609
        %v1613 = vpop.permute.xlu0 %1612
        %v1615 = vadd.f32 %v1607, %v1613
        %v1616 = vadd.f32 %v1608, %v1613
        %v1617 = vsub.f32 0.0, %v1615
        %v1618 = vsub.f32 0.0, %v1616
        %v1619 = vmul.f32 %v1617, 1.442695
        %v1620 = vpow.pop %v1619
        %v1621 = vmul.f32 %v1618, 1.442695
        %v1622 = vpow.pop %v1621
        %v1623 = vadd.f32 %v1620, 1.0
        %v1624 = vadd.f32 %v1622, 1.0
        %v1625 = vrcp.pop %v1623
        %v1626 = vmul.f32 1.0, %v1625
        %v1627 = vrcp.pop %v1624
        %v1628 = vmul.f32 1.0, %v1627
        %v1629 = vmul.f32 %v1615, %v1626
        %v1630 = vmul.f32 %v1616, %v1628
        %v1631 = vadd.f32 %v1629, %v1106
        %v1632 = vadd.f32 %v1630, %v1107
        %1633 = vst [vmem:[%s553] sm:$0xff] %v1631
        %1634 = vst [vmem:[%s553 + $0x8] sm:$0xff] %v1632
        %p1635 = scmp.lt.s32.totalorder %s29, 1
        %s1636 = scalar_select %p1635, %s29, 1
        %s1637 = smul.addr %s1636, 2
        %s1638 = smul.addr %s1637, 8
        %s1639 = scalar_lea.vmem %s15, %s1638
        // Predicated region
        $region97: #{_lambda_.1} parent=79 // pred_check
          %p1640 = pneg %p367
        $region98: #{_lambda_.1} parent=79 // pred_check_branch
          %1642 = sbr.rel (%p1640) target = $region100
        $region99: #{_lambda_.1} parent=79 // pred_region
          _
        $region100: #{_lambda_.1} parent=79 // pred_fallthru
          _
      $region80: #{_lambda_.1} parent=5 // pred_fallthru
        _
      %p1643 = scmp.le.s32.totalorder 2, %s24
      // Predicated region
      $region101: #{_lambda_.1} parent=5 // pred_check
        %p1644 = pneg %p1643
      $region102: #{_lambda_.1} parent=5 // pred_check_branch
        %1646 = sbr.rel (%p1644) target = $region104
      $region103: #{_lambda_.1} parent=5 // pred_region
        %s1647 = ssub.s32 %s24, 2
        // Predicated region
        $region105: #{_lambda_.1} parent=103 // pred_check
          %p1648 = pneg %p373
        $region106: #{_lambda_.1} parent=103 // pred_check_branch
          %1650 = sbr.rel (%p1648) target = $region108
        $region107: #{_lambda_.1} parent=103 // pred_region
          %p1651 = scmp.lt.s32.totalorder %s30, 1
          %s1652 = scalar_select %p1651, %s30, 1
          %s1653 = smul.addr %s1652, 2
          %s1654 = smul.addr %s1653, 8
          %s1655 = scalar_lea.vmem %s15, %s1654
        $region108: #{_lambda_.1} parent=103 // pred_fallthru
          _
      $region104: #{_lambda_.1} parent=5 // pred_fallthru
        _
    $region6: #{_lambda_.1} parent=1 // loop_footer
      %s28 = sadd.s32 1, %s24
    $region7: #{_lambda_.1} parent=1 // loop_footer_branch
      %23 = sbr.rel target = $region3
    $region8: #{_lambda_.1} parent=1 // loop_exit
      _
    %1656 = vsyncpa [#allocation3], 1
    %s1657 = scalar_lea.sflag [#allocation3], 1
    %1658 = vsyncpa %s1657, 1
    %1659 = vsyncpa [#allocation5], 1
    %1660 = vsyncpa [#allocation8], 1

</llo_original>
